<compile_context>
chip_gen: v7x
topology: tpu7x:2x2x1
jax: 0.10.0
libtpu: 0.0.40
codegen_flags: <defaults>
</compile_context>

<pallas_src>
import functools

import jax
import jax.numpy as jnp
from jax.experimental import pallas as pl
from jax.experimental.pallas import tpu as pltpu

LN_EPS = 1e-5


def _layernorm(h, gamma, beta):
    mu = jnp.mean(h, axis=-1, keepdims=True)
    var = jnp.mean((h - mu) ** 2, axis=-1, keepdims=True)
    return (h - mu) * jax.lax.rsqrt(var + LN_EPS) * gamma + beta


def _gelu_exact(h):
    # matches torch.nn.GELU() default (erf-based)
    return 0.5 * h * (1.0 + jax.lax.erf(h * jnp.float32(0.7071067811865476)))


def _gelu_tanh(h):
    # optional tanh approximation (EUP path) — semantics change vs torch default
    return jax.nn.gelu(h, approximate=True)


def cross_modal_attention_kernel(
    x_ref, y_ref,
    wvo_ref, bvo_ref,        # folded attention weight [E, E] (bf16) + bias [1, E] (f32)
    g1_ref, be1_ref,         # LayerNorm 1
    w1_ref, b1_ref,          # FFN linear 1 block: [E, th] (bf16), [1, th] (f32)
    w2_ref, b2_ref,          # FFN linear 2 block: [th, E] (bf16), [1, E] (f32)
    g2_ref, be2_ref,         # LayerNorm 2
    o_ref,                   # f32 output block, VMEM-resident across the h axis
    xout_f32, xout_bf16,     # scratch: LN1 output (residual path / MXU operand)
    *, approx_gelu=False,
):
    hi = pl.program_id(1)
    nh = pl.num_programs(1)

    # --- first hidden step: attention (softmax==1 -> single folded matmul) + LN1 ---
    @pl.when(hi == 0)
    def _():
        x = x_ref[...].astype(jnp.float32)
        attn = jnp.dot(y_ref[...], wvo_ref[...],
                       preferred_element_type=jnp.float32) + bvo_ref[...]
        xo = _layernorm(x + attn, g1_ref[...], be1_ref[...])
        xout_f32[...] = xo
        xout_bf16[...] = xo.astype(jnp.bfloat16)

    # --- FFN partial: Linear(E, th) -> GELU -> Linear(th, E) on this hidden tile ---
    h = jnp.dot(xout_bf16[...], w1_ref[...],
                preferred_element_type=jnp.float32) + b1_ref[...]
    h = _gelu_tanh(h) if approx_gelu else _gelu_exact(h)
    partial = jnp.dot(h.astype(jnp.bfloat16), w2_ref[...],
                      preferred_element_type=jnp.float32)

    # Accumulate straight into the output block: no zero-init, no extra scratch.
    @pl.when(hi == 0)
    def _():
        o_ref[...] = partial

    @pl.when(hi != 0)
    def _():
        o_ref[...] += partial

    # --- last hidden step: bias + residual + LN2 ---
    @pl.when(hi == nh - 1)
    def _():
        ffn = o_ref[...] + b2_ref[...]
        o_ref[...] = _layernorm(xout_f32[...] + ffn, g2_ref[...], be2_ref[...])


def init_params(key, embed_dim):
    """Deterministic synthetic parameters matching the PyTorch module's shapes
    (nn.MultiheadAttention(E, 8) + 2x LayerNorm(E) + Linear(E,4E)/Linear(4E,E))."""
    E = embed_dim
    H = 4 * E
    ks = jax.random.split(key, 10)
    s = 1.0 / jnp.sqrt(jnp.float32(E))

    def u(k, shape, scale):
        return jax.random.uniform(k, shape, jnp.float32, -scale, scale)

    return dict(
        in_proj_w=u(ks[0], (3 * E, E), s),     # torch layout [3E, E]; only V slice matters
        in_proj_b=u(ks[1], (3 * E,), s),
        out_proj_w=u(ks[2], (E, E), s),
        out_proj_b=u(ks[3], (E,), s),
        ln1_g=jnp.ones((E,), jnp.float32) + 0.01 * u(ks[4], (E,), 1.0),
        ln1_b=0.01 * u(ks[5], (E,), 1.0),
        ffn_w1=u(ks[6], (H, E), s),            # torch layout [out, in]
        ffn_b1=u(ks[7], (H,), s),
        ffn_w2=u(ks[8], (E, H), 1.0 / jnp.sqrt(jnp.float32(H))),
        ffn_b2=u(ks[9], (E,), 1.0 / jnp.sqrt(jnp.float32(H))),
        ln2_g=jnp.ones((E,), jnp.float32),
        ln2_b=jnp.zeros((E,), jnp.float32),
    )


def prepare_kernel_params(params, embed_dim):
    """One-time offline prep: slice the value projection, fold Wv into Wout (in f32),
    pre-transpose to [in, out], cast matmul weights to bf16."""
    E = embed_dim
    H = 4 * E
    wv = params["in_proj_w"][2 * E:3 * E, :]          # torch: v = y @ wv.T + bv
    bv = params["in_proj_b"][2 * E:3 * E]
    wo = params["out_proj_w"]                          # torch: attn = v @ wo.T + bo
    bo = params["out_proj_b"]
    wvo = wv.T @ wo.T                                  # [E, E] f32, used as y @ wvo
    bvo = bv @ wo.T + bo                               # [E]
    return dict(
        wvo=wvo.astype(jnp.bfloat16),
        bvo=bvo.reshape(1, E).astype(jnp.float32),
        g1=params["ln1_g"].reshape(1, E).astype(jnp.float32),
        be1=params["ln1_b"].reshape(1, E).astype(jnp.float32),
        w1=params["ffn_w1"].T.astype(jnp.bfloat16),    # [E, 4E]
        b1=params["ffn_b1"].reshape(1, H).astype(jnp.float32),
        w2=params["ffn_w2"].T.astype(jnp.bfloat16),    # [4E, E]
        b2=params["ffn_b2"].reshape(1, E).astype(jnp.float32),
        g2=params["ln2_g"].reshape(1, E).astype(jnp.float32),
        be2=params["ln2_b"].reshape(1, E).astype(jnp.float32),
    )


def _vmem_budget_bytes():
    """Per-generation scoped-VMEM target: ~85% of physical VMEM per TensorCore
    (~109 MiB on v5e/v6e's 128 MiB, ~54 MiB on v7x's 64 MiB)."""
    try:
        cap = int(pltpu.get_tpu_info().vmem_capacity_bytes)
    except Exception:
        cap = 64 * 2 ** 20   # conservative fallback (v7x size)
    return int(cap * 0.85)


def _estimate_vmem_bytes(tb, th, E, H):
    """Explicit footprint: 2 buffers per pipelined block + scratch.  Constants are
    conservatively counted as double-buffered (single-buffering them is headroom)."""
    r8 = lambda n: ((n + 7) // 8) * 8
    r128 = lambda n: ((n + 127) // 128) * 128
    tile = lambda rows, cols, nbytes: r8(rows) * r128(cols) * nbytes
    total = 0
    total += 2 * 2 * tile(tb, E, 2)                    # x, y bf16 tiles, double buffered
    total += 2 * tile(tb, E, 4)                        # f32 output tile, double buffered
    total += 2 * tile(E, E, 2)                         # wvo bf16
    total += 2 * tile(E, th, 2) + 2 * tile(th, E, 2)   # w1 / w2 blocks
    total += 2 * (6 * tile(1, E, 4) + tile(1, th, 4))  # bias / LN rows
    total += tile(tb, E, 4) + tile(tb, E, 2)           # scratch: xout f32 + bf16
    return total


def _choose_tiles(B, E, H, budget):
    """tb first (controls weight re-streams per batch tile), then the largest th
    (multiple of 128, divisor of H) that fits the VMEM budget."""
    b_ceil = max(8, ((B + 7) // 8) * 8)
    tb_cands = sorted({min(c, b_ceil) for c in (1024, 512, 256, 128, 64, 32, 16, 8)},
                      reverse=True)
    th_cands = [c for c in (4096, 2048, 1024, 512, 256, 128) if c < H and H % c == 0]
    th_cands = sorted(set(th_cands + [H]), reverse=True)
    for tb in tb_cands:
        for th in th_cands:
            if _estimate_vmem_bytes(tb, th, E, H) <= budget:
                return tb, th
    return tb_cands[-1], th_cands[-1]


def cross_modal_attention(x, y, kp, *, tb=None, th=None,
                          single_buffer_consts=True, approx_gelu=False):
    B, E = x.shape
    H = kp["w1"].shape[1]

    budget = _vmem_budget_bytes()
    auto_tb, auto_th = _choose_tiles(B, E, H, budget)
    tb = auto_tb if tb is None else tb
    th = auto_th if th is None else th
    assert H % th == 0 and (th == H or th % 128 == 0), "bad FFN hidden tile"
    nb = pl.cdiv(B, tb)
    assert nb == 1 or tb % 8 == 0, "batch tile must be a multiple of 8 (or cover the batch)"
    nh = H // th
    B_pad = nb * tb

    # bf16 inputs: halves x/y HBM DMA and their double-buffered VMEM tiles; the
    # residual path upcasts in-kernel (reflected in the test tolerance).
    x_in = x.astype(jnp.bfloat16)
    y_in = y.astype(jnp.bfloat16)
    if B_pad != B:
        pad = B_pad - B
        x_in = jnp.pad(x_in, ((0, pad), (0, 0)))   # zero rows are sliced off after the call
        y_in = jnp.pad(y_in, ((0, pad), (0, 0)))

    est = _estimate_vmem_bytes(tb, th, E, H)
    vmem_limit = int(min(budget, max(2 * est, 32 * 2 ** 20)))

    def build(use_single_buffer):
        def const_spec(shape):
            nd = len(shape)
            idx = lambda i, h, _nd=nd: (0,) * _nd
            if use_single_buffer:
                # block index never changes -> double buffering only wastes VMEM
                return pl.BlockSpec(shape, idx, pipeline_mode=pl.Buffered(1))
            return pl.BlockSpec(shape, idx)

        in_specs = [
            pl.BlockSpec((tb, E), lambda i, h: (i, 0)),   # x
            pl.BlockSpec((tb, E), lambda i, h: (i, 0)),   # y
            const_spec((E, E)), const_spec((1, E)),       # wvo, bvo
            const_spec((1, E)), const_spec((1, E)),       # ln1 gamma / beta
            pl.BlockSpec((E, th), lambda i, h: (0, h)),   # w1 block
            pl.BlockSpec((1, th), lambda i, h: (0, h)),   # b1 block
            pl.BlockSpec((th, E), lambda i, h: (h, 0)),   # w2 block
            const_spec((1, E)),                           # b2
            const_spec((1, E)), const_spec((1, E)),       # ln2 gamma / beta
        ]
        out_specs = pl.BlockSpec((tb, E), lambda i, h: (i, 0))
        scratch_shapes = [
            pltpu.VMEM((tb, E), jnp.float32),    # LN1 output (residual path)
            pltpu.VMEM((tb, E), jnp.bfloat16),   # LN1 output (MXU operand)
        ]
        return pl.pallas_call(
            functools.partial(cross_modal_attention_kernel, approx_gelu=approx_gelu),
            out_shape=jax.ShapeDtypeStruct((B_pad, E), jnp.float32),
            grid=(nb, nh),
            in_specs=in_specs,
            out_specs=out_specs,
            scratch_shapes=scratch_shapes,
            compiler_params=pltpu.CompilerParams(
                dimension_semantics=("parallel", "arbitrary"),
                vmem_limit_bytes=vmem_limit,
            ),
        )

    args = (x_in, y_in, kp["wvo"], kp["bvo"], kp["g1"], kp["be1"],
            kp["w1"], kp["b1"], kp["w2"], kp["b2"], kp["g2"], kp["be2"])
    if single_buffer_consts:
        try:
            out = build(True)(*args)
        except Exception:
            # pipeline_mode=pl.Buffered(1) unsupported on this jax build: fall back
            # to default double-buffered constants (perf-only delta, not correctness).
            out = build(False)(*args)
    else:
        out = build(False)(*args)

    return out[:B] if B_pad != B else out


def cross_modal_attention_ref(x, y, params):
    """Pure-JAX f32 reference mirroring the PyTorch forward (seq_len == 1, eval mode)."""
    E = x.shape[-1]
    wv = params["in_proj_w"][2 * E:3 * E, :]
    bv = params["in_proj_b"][2 * E:3 * E]
    v = y @ wv.T + bv
    attn = v @ params["out_proj_w"].T + params["out_proj_b"]

    def ln(h, g, b):
        mu = jnp.mean(h, -1, keepdims=True)
        var = jnp.mean((h - mu) ** 2, -1, keepdims=True)
        return (h - mu) / jnp.sqrt(var + LN_EPS) * g + b

    x_out = ln(x + attn, params["ln1_g"], params["ln1_b"])
    h = x_out @ params["ffn_w1"].T + params["ffn_b1"]
    h = 0.5 * h * (1.0 + jax.lax.erf(h / jnp.sqrt(2.0)))
    ffn = h @ params["ffn_w2"].T + params["ffn_b2"]
    return ln(x_out + ffn, params["ln2_g"], params["ln2_b"])


if __name__ == "__main__":
    B, E = 8, 32          # embed_dim=32, num_heads=8 (head_dim=4)
    key = jax.random.PRNGKey(0)
    kx, ky, kparam = jax.random.split(key, 3)
    x = jax.random.normal(kx, (B, E), jnp.float32)
    y = jax.random.normal(ky, (B, E), jnp.float32)
    params = init_params(kparam, E)
    kparams = prepare_kernel_params(params, E)   # one-time weight prep (fold + transpose + bf16)

    out = cross_modal_attention(x, y, kparams)
    out = jax.block_until_ready(out)

    ref = cross_modal_attention_ref(x, y, params)
    assert out.shape == (B, E)
    # bf16 x/y inputs + bf16 folded attention weight + bf16 MXU operands -> loosened
    # tolerance vs the exact-f32 reference.
    assert jnp.allclose(out, ref, atol=4e-2, rtol=4e-2), "mismatch vs pure-JAX reference"
    print("KERNEL_OK")
</pallas_src>

<mosaic_0001>
module attributes {stable_mosaic.version = 11 : i64} {
  func.func @cross_modal_attention_kernel(%arg0: i32, %arg1: i32, %arg2: memref<8x32xbf16, #tpu.memory_space<vmem>>, %arg3: memref<8x32xbf16, #tpu.memory_space<vmem>>, %arg4: memref<32x32xbf16, #tpu.memory_space<vmem>>, %arg5: memref<1x32xf32, #tpu.memory_space<vmem>>, %arg6: memref<1x32xf32, #tpu.memory_space<vmem>>, %arg7: memref<1x32xf32, #tpu.memory_space<vmem>>, %arg8: memref<32x128xbf16, #tpu.memory_space<vmem>>, %arg9: memref<1x128xf32, #tpu.memory_space<vmem>>, %arg10: memref<128x32xbf16, #tpu.memory_space<vmem>>, %arg11: memref<1x32xf32, #tpu.memory_space<vmem>>, %arg12: memref<1x32xf32, #tpu.memory_space<vmem>>, %arg13: memref<1x32xf32, #tpu.memory_space<vmem>>, %arg14: memref<8x32xf32, #tpu.memory_space<vmem>>, %arg15: memref<8x32xf32, #tpu.memory_space<vmem>>, %arg16: memref<8x32xbf16, #tpu.memory_space<vmem>>) attributes {dimension_semantics = [#tpu.dimension_semantics<parallel>, #tpu.dimension_semantics<arbitrary>], iteration_bounds = array<i64: 1, 1>, scalar_prefetch = 0 : i64, scratch_operands = 2 : i64, tpu.core_type = #tpu.core_type<tc>, window_params = [{transform_indices = @transform_0, window_bounds = array<i64: 8, 32>}, {transform_indices = @transform_1, window_bounds = array<i64: 8, 32>}, {pipeline_mode = #tpu.pipeline_mode<synchronous>, transform_indices = @transform_2, window_bounds = array<i64: 32, 32>}, {pipeline_mode = #tpu.pipeline_mode<synchronous>, transform_indices = @transform_3, window_bounds = array<i64: 1, 32>}, {pipeline_mode = #tpu.pipeline_mode<synchronous>, transform_indices = @transform_4, window_bounds = array<i64: 1, 32>}, {pipeline_mode = #tpu.pipeline_mode<synchronous>, transform_indices = @transform_5, window_bounds = array<i64: 1, 32>}, {transform_indices = @transform_6, window_bounds = array<i64: 32, 128>}, {transform_indices = @transform_7, window_bounds = array<i64: 1, 128>}, {transform_indices = @transform_8, window_bounds = array<i64: 128, 32>}, {pipeline_mode = #tpu.pipeline_mode<synchronous>, transform_indices = @transform_9, window_bounds = array<i64: 1, 32>}, {pipeline_mode = #tpu.pipeline_mode<synchronous>, transform_indices = @transform_10, window_bounds = array<i64: 1, 32>}, {pipeline_mode = #tpu.pipeline_mode<synchronous>, transform_indices = @transform_11, window_bounds = array<i64: 1, 32>}, {transform_indices = @transform_12, window_bounds = array<i64: 8, 32>}]} {
    %c0_i32 = arith.constant 0 : i32
    %0 = arith.cmpi eq, %arg1, %c0_i32 : i32
    %1 = arith.extui %0 : i1 to i32
    %c0_i32_0 = arith.constant 0 : i32
    %2 = arith.cmpi ne, %1, %c0_i32_0 : i32
    scf.if %2 {
      %c0_18 = arith.constant 0 : index
      %c0_19 = arith.constant 0 : index
      %29 = vector.load %arg2[%c0_18, %c0_19] : memref<8x32xbf16, #tpu.memory_space<vmem>>, vector<8x32xbf16>
      %30 = arith.extf %29 : vector<8x32xbf16> to vector<8x32xf32>
      %c0_20 = arith.constant 0 : index
      %c0_21 = arith.constant 0 : index
      %31 = vector.load %arg3[%c0_20, %c0_21] : memref<8x32xbf16, #tpu.memory_space<vmem>>, vector<8x32xbf16>
      %c0_22 = arith.constant 0 : index
      %c0_23 = arith.constant 0 : index
      %32 = vector.load %arg4[%c0_22, %c0_23] : memref<32x32xbf16, #tpu.memory_space<vmem>>, vector<32x32xbf16>
      %cst_24 = arith.constant dense<0.000000e+00> : vector<8x32xf32>
      %33 = tpu.matmul %31, %32, %cst_24 {dimension_numbers = #tpu.dot_dimension_numbers<[1], [0], [0], [1], [0, 0, 1, 1], [], []>} : vector<8x32xbf16>, vector<32x32xbf16>, vector<8x32xf32> -> vector<8x32xf32>
      %c0_25 = arith.constant 0 : index
      %c0_26 = arith.constant 0 : index
      %34 = vector.load %arg5[%c0_25, %c0_26] : memref<1x32xf32, #tpu.memory_space<vmem>>, vector<1x32xf32>
      %35 = vector.broadcast %34 : vector<1x32xf32> to vector<8x32xf32>
      %36 = arith.addf %33, %35 : vector<8x32xf32>
      %37 = arith.addf %30, %36 : vector<8x32xf32>
      %c0_27 = arith.constant 0 : index
      %c0_28 = arith.constant 0 : index
      %38 = vector.load %arg6[%c0_27, %c0_28] : memref<1x32xf32, #tpu.memory_space<vmem>>, vector<1x32xf32>
      %c0_29 = arith.constant 0 : index
      %c0_30 = arith.constant 0 : index
      %39 = vector.load %arg7[%c0_29, %c0_30] : memref<1x32xf32, #tpu.memory_space<vmem>>, vector<1x32xf32>
      %cst_31 = arith.constant dense<0.000000e+00> : vector<8xf32>
      %40 = vector.multi_reduction <add>, %37, %cst_31 [1] : vector<8x32xf32> to vector<8xf32>
      %41 = vector.shape_cast %40 : vector<8xf32> to vector<8x1xf32>
      %cst_32 = arith.constant 3.200000e+01 : f32
      %42 = vector.broadcast %cst_32 : f32 to vector<8x1xf32>
      %43 = arith.divf %41, %42 : vector<8x1xf32>
      %44 = vector.broadcast %43 : vector<8x1xf32> to vector<8x32xf32>
      %45 = arith.subf %37, %44 : vector<8x32xf32>
      %46 = arith.mulf %45, %45 : vector<8x32xf32>
      %cst_33 = arith.constant dense<0.000000e+00> : vector<8xf32>
      %47 = vector.multi_reduction <add>, %46, %cst_33 [1] : vector<8x32xf32> to vector<8xf32>
      %48 = vector.shape_cast %47 : vector<8xf32> to vector<8x1xf32>
      %cst_34 = arith.constant 3.200000e+01 : f32
      %49 = vector.broadcast %cst_34 : f32 to vector<8x1xf32>
      %50 = arith.divf %48, %49 : vector<8x1xf32>
      %51 = vector.broadcast %43 : vector<8x1xf32> to vector<8x32xf32>
      %52 = arith.subf %37, %51 : vector<8x32xf32>
      %cst_35 = arith.constant 9.99999974E-6 : f32
      %53 = vector.broadcast %cst_35 : f32 to vector<8x1xf32>
      %54 = arith.addf %50, %53 : vector<8x1xf32>
      %55 = math.rsqrt %54 : vector<8x1xf32>
      %56 = vector.broadcast %55 : vector<8x1xf32> to vector<8x32xf32>
      %57 = arith.mulf %52, %56 : vector<8x32xf32>
      %58 = vector.broadcast %38 : vector<1x32xf32> to vector<8x32xf32>
      %59 = arith.mulf %57, %58 : vector<8x32xf32>
      %60 = vector.broadcast %39 : vector<1x32xf32> to vector<8x32xf32>
      %61 = arith.addf %59, %60 : vector<8x32xf32>
      %c0_36 = arith.constant 0 : index
      %c0_37 = arith.constant 0 : index
      %62 = vector.load %arg15[%c0_36, %c0_37] : memref<8x32xf32, #tpu.memory_space<vmem>>, vector<8x32xf32>
      tpu.vector_store %arg15[%c0_36, %c0_37], %61 {strides = array<i32>} : memref<8x32xf32, #tpu.memory_space<vmem>>, vector<8x32xf32>,
      %63 = arith.truncf %61 : vector<8x32xf32> to vector<8x32xbf16>
      %c0_38 = arith.constant 0 : index
      %c0_39 = arith.constant 0 : index
      %64 = vector.load %arg16[%c0_38, %c0_39] : memref<8x32xbf16, #tpu.memory_space<vmem>>, vector<8x32xbf16>
      tpu.vector_store %arg16[%c0_38, %c0_39], %63 {strides = array<i32>} : memref<8x32xbf16, #tpu.memory_space<vmem>>, vector<8x32xbf16>,
    } else {
    }
    %c0 = arith.constant 0 : index
    %c0_1 = arith.constant 0 : index
    %3 = vector.load %arg16[%c0, %c0_1] : memref<8x32xbf16, #tpu.memory_space<vmem>>, vector<8x32xbf16>
    %c0_2 = arith.constant 0 : index
    %c0_3 = arith.constant 0 : index
    %4 = vector.load %arg8[%c0_2, %c0_3] : memref<32x128xbf16, #tpu.memory_space<vmem>>, vector<32x128xbf16>
    %cst = arith.constant dense<0.000000e+00> : vector<8x128xf32>
    %5 = tpu.matmul %3, %4, %cst {dimension_numbers = #tpu.dot_dimension_numbers<[1], [0], [0], [1], [0, 0, 1, 1], [], []>} : vector<8x32xbf16>, vector<32x128xbf16>, vector<8x128xf32> -> vector<8x128xf32>
    %c0_4 = arith.constant 0 : index
    %c0_5 = arith.constant 0 : index
    %6 = vector.load %arg9[%c0_4, %c0_5] : memref<1x128xf32, #tpu.memory_space<vmem>>, vector<1x128xf32>
    %7 = vector.broadcast %6 : vector<1x128xf32> to vector<8x128xf32>
    %8 = arith.addf %5, %7 : vector<8x128xf32>
    %cst_6 = arith.constant 5.000000e-01 : f32
    %9 = vector.broadcast %cst_6 : f32 to vector<8x128xf32>
    %10 = arith.mulf %9, %8 : vector<8x128xf32>
    %cst_7 = arith.constant 0.707106769 : f32
    %11 = vector.broadcast %cst_7 : f32 to vector<8x128xf32>
    %12 = arith.mulf %8, %11 : vector<8x128xf32>
    %13 = math.erf %12 : vector<8x128xf32>
    %cst_8 = arith.constant 1.000000e+00 : f32
    %14 = vector.broadcast %cst_8 : f32 to vector<8x128xf32>
    %15 = arith.addf %14, %13 : vector<8x128xf32>
    %16 = arith.mulf %10, %15 : vector<8x128xf32>
    %17 = arith.truncf %16 : vector<8x128xf32> to vector<8x128xbf16>
    %c0_9 = arith.constant 0 : index
    %c0_10 = arith.constant 0 : index
    %18 = vector.load %arg10[%c0_9, %c0_10] : memref<128x32xbf16, #tpu.memory_space<vmem>>, vector<128x32xbf16>
    %cst_11 = arith.constant dense<0.000000e+00> : vector<8x32xf32>
    %19 = tpu.matmul %17, %18, %cst_11 {dimension_numbers = #tpu.dot_dimension_numbers<[1], [0], [0], [1], [0, 0, 1, 1], [], []>} : vector<8x128xbf16>, vector<128x32xbf16>, vector<8x32xf32> -> vector<8x32xf32>
    %c0_i32_12 = arith.constant 0 : i32
    %20 = arith.cmpi eq, %arg1, %c0_i32_12 : i32
    %21 = arith.extui %20 : i1 to i32
    %c0_i32_13 = arith.constant 0 : i32
    %22 = arith.cmpi ne, %21, %c0_i32_13 : i32
    scf.if %22 {
      %c0_18 = arith.constant 0 : index
      %c0_19 = arith.constant 0 : index
      %29 = vector.load %arg14[%c0_18, %c0_19] : memref<8x32xf32, #tpu.memory_space<vmem>>, vector<8x32xf32>
      tpu.vector_store %arg14[%c0_18, %c0_19], %19 {strides = array<i32>} : memref<8x32xf32, #tpu.memory_space<vmem>>, vector<8x32xf32>,
    } else {
    }
    %c0_i32_14 = arith.constant 0 : i32
    %23 = arith.cmpi ne, %arg1, %c0_i32_14 : i32
    %24 = arith.extui %23 : i1 to i32
    %c0_i32_15 = arith.constant 0 : i32
    %25 = arith.cmpi ne, %24, %c0_i32_15 : i32
    scf.if %25 {
      %c0_18 = arith.constant 0 : index
      %c0_19 = arith.constant 0 : index
      %29 = vector.load %arg14[%c0_18, %c0_19] : memref<8x32xf32, #tpu.memory_space<vmem>>, vector<8x32xf32>
      %30 = arith.addf %29, %19 : vector<8x32xf32>
      %c0_20 = arith.constant 0 : index
      %c0_21 = arith.constant 0 : index
      %31 = vector.load %arg14[%c0_20, %c0_21] : memref<8x32xf32, #tpu.memory_space<vmem>>, vector<8x32xf32>
      tpu.vector_store %arg14[%c0_20, %c0_21], %30 {strides = array<i32>} : memref<8x32xf32, #tpu.memory_space<vmem>>, vector<8x32xf32>,
    } else {
    }
    %c0_i32_16 = arith.constant 0 : i32
    %26 = arith.cmpi eq, %arg1, %c0_i32_16 : i32
    %27 = arith.extui %26 : i1 to i32
    %c0_i32_17 = arith.constant 0 : i32
    %28 = arith.cmpi ne, %27, %c0_i32_17 : i32
    scf.if %28 {
      %c0_18 = arith.constant 0 : index
      %c0_19 = arith.constant 0 : index
      %29 = vector.load %arg14[%c0_18, %c0_19] : memref<8x32xf32, #tpu.memory_space<vmem>>, vector<8x32xf32>
      %c0_20 = arith.constant 0 : index
      %c0_21 = arith.constant 0 : index
      %30 = vector.load %arg11[%c0_20, %c0_21] : memref<1x32xf32, #tpu.memory_space<vmem>>, vector<1x32xf32>
      %31 = vector.broadcast %30 : vector<1x32xf32> to vector<8x32xf32>
      %32 = arith.addf %29, %31 : vector<8x32xf32>
      %c0_22 = arith.constant 0 : index
      %c0_23 = arith.constant 0 : index
      %33 = vector.load %arg15[%c0_22, %c0_23] : memref<8x32xf32, #tpu.memory_space<vmem>>, vector<8x32xf32>
      %34 = arith.addf %33, %32 : vector<8x32xf32>
      %c0_24 = arith.constant 0 : index
      %c0_25 = arith.constant 0 : index
      %35 = vector.load %arg12[%c0_24, %c0_25] : memref<1x32xf32, #tpu.memory_space<vmem>>, vector<1x32xf32>
      %c0_26 = arith.constant 0 : index
      %c0_27 = arith.constant 0 : index
      %36 = vector.load %arg13[%c0_26, %c0_27] : memref<1x32xf32, #tpu.memory_space<vmem>>, vector<1x32xf32>
      %cst_28 = arith.constant dense<0.000000e+00> : vector<8xf32>
      %37 = vector.multi_reduction <add>, %34, %cst_28 [1] : vector<8x32xf32> to vector<8xf32>
      %38 = vector.shape_cast %37 : vector<8xf32> to vector<8x1xf32>
      %cst_29 = arith.constant 3.200000e+01 : f32
      %39 = vector.broadcast %cst_29 : f32 to vector<8x1xf32>
      %40 = arith.divf %38, %39 : vector<8x1xf32>
      %41 = vector.broadcast %40 : vector<8x1xf32> to vector<8x32xf32>
      %42 = arith.subf %34, %41 : vector<8x32xf32>
      %43 = arith.mulf %42, %42 : vector<8x32xf32>
      %cst_30 = arith.constant dense<0.000000e+00> : vector<8xf32>
      %44 = vector.multi_reduction <add>, %43, %cst_30 [1] : vector<8x32xf32> to vector<8xf32>
      %45 = vector.shape_cast %44 : vector<8xf32> to vector<8x1xf32>
      %cst_31 = arith.constant 3.200000e+01 : f32
      %46 = vector.broadcast %cst_31 : f32 to vector<8x1xf32>
      %47 = arith.divf %45, %46 : vector<8x1xf32>
      %48 = vector.broadcast %40 : vector<8x1xf32> to vector<8x32xf32>
      %49 = arith.subf %34, %48 : vector<8x32xf32>
      %cst_32 = arith.constant 9.99999974E-6 : f32
      %50 = vector.broadcast %cst_32 : f32 to vector<8x1xf32>
      %51 = arith.addf %47, %50 : vector<8x1xf32>
      %52 = math.rsqrt %51 : vector<8x1xf32>
      %53 = vector.broadcast %52 : vector<8x1xf32> to vector<8x32xf32>
      %54 = arith.mulf %49, %53 : vector<8x32xf32>
      %55 = vector.broadcast %35 : vector<1x32xf32> to vector<8x32xf32>
      %56 = arith.mulf %54, %55 : vector<8x32xf32>
      %57 = vector.broadcast %36 : vector<1x32xf32> to vector<8x32xf32>
      %58 = arith.addf %56, %57 : vector<8x32xf32>
      %c0_33 = arith.constant 0 : index
      %c0_34 = arith.constant 0 : index
      %59 = vector.load %arg14[%c0_33, %c0_34] : memref<8x32xf32, #tpu.memory_space<vmem>>, vector<8x32xf32>
      tpu.vector_store %arg14[%c0_33, %c0_34], %58 {strides = array<i32>} : memref<8x32xf32, #tpu.memory_space<vmem>>, vector<8x32xf32>,
    } else {
    }
    return
  }
  func.func @transform_0(%arg0: i32, %arg1: i32) -> (i32, i32) {
    %c0_i32 = arith.constant 0 : i32
    %c0_i32_0 = arith.constant 0 : i32
    return %arg0, %c0_i32 : i32, i32
  }
  func.func @transform_1(%arg0: i32, %arg1: i32) -> (i32, i32) {
    %c0_i32 = arith.constant 0 : i32
    %c0_i32_0 = arith.constant 0 : i32
    return %arg0, %c0_i32 : i32, i32
  }
  func.func @transform_2(%arg0: i32, %arg1: i32) -> (i32, i32) {
    %c0_i32 = arith.constant 0 : i32
    %c0_i32_0 = arith.constant 0 : i32
    %c0_i32_1 = arith.constant 0 : i32
    return %c0_i32, %c0_i32_0 : i32, i32
  }
  func.func @transform_3(%arg0: i32, %arg1: i32) -> (i32, i32) {
    %c0_i32 = arith.constant 0 : i32
    %c0_i32_0 = arith.constant 0 : i32
    %c0_i32_1 = arith.constant 0 : i32
    return %c0_i32, %c0_i32_0 : i32, i32
  }
  func.func @transform_4(%arg0: i32, %arg1: i32) -> (i32, i32) {
    %c0_i32 = arith.constant 0 : i32
    %c0_i32_0 = arith.constant 0 : i32
    %c0_i32_1 = arith.constant 0 : i32
    return %c0_i32, %c0_i32_0 : i32, i32
  }
  func.func @transform_5(%arg0: i32, %arg1: i32) -> (i32, i32) {
    %c0_i32 = arith.constant 0 : i32
    %c0_i32_0 = arith.constant 0 : i32
    %c0_i32_1 = arith.constant 0 : i32
    return %c0_i32, %c0_i32_0 : i32, i32
  }
  func.func @transform_6(%arg0: i32, %arg1: i32) -> (i32, i32) {
    %c0_i32 = arith.constant 0 : i32
    %c0_i32_0 = arith.constant 0 : i32
    return %c0_i32, %arg1 : i32, i32
  }
  func.func @transform_7(%arg0: i32, %arg1: i32) -> (i32, i32) {
    %c0_i32 = arith.constant 0 : i32
    %c0_i32_0 = arith.constant 0 : i32
    return %c0_i32, %arg1 : i32, i32
  }
  func.func @transform_8(%arg0: i32, %arg1: i32) -> (i32, i32) {
    %c0_i32 = arith.constant 0 : i32
    %c0_i32_0 = arith.constant 0 : i32
    return %arg1, %c0_i32 : i32, i32
  }
  func.func @transform_9(%arg0: i32, %arg1: i32) -> (i32, i32) {
    %c0_i32 = arith.constant 0 : i32
    %c0_i32_0 = arith.constant 0 : i32
    %c0_i32_1 = arith.constant 0 : i32
    return %c0_i32, %c0_i32_0 : i32, i32
  }
  func.func @transform_10(%arg0: i32, %arg1: i32) -> (i32, i32) {
    %c0_i32 = arith.constant 0 : i32
    %c0_i32_0 = arith.constant 0 : i32
    %c0_i32_1 = arith.constant 0 : i32
    return %c0_i32, %c0_i32_0 : i32, i32
  }
  func.func @transform_11(%arg0: i32, %arg1: i32) -> (i32, i32) {
    %c0_i32 = arith.constant 0 : i32
    %c0_i32_0 = arith.constant 0 : i32
    %c0_i32_1 = arith.constant 0 : i32
    return %c0_i32, %c0_i32_0 : i32, i32
  }
  func.func @transform_12(%arg0: i32, %arg1: i32) -> (i32, i32) {
    %c0_i32 = arith.constant 0 : i32
    %c0_i32_0 = arith.constant 0 : i32
    return %arg0, %c0_i32 : i32, i32
  }
}

module attributes {stable_mosaic.version = 11 : i64} {
  func.func @cross_modal_attention_kernel(%arg0: i32, %arg1: i32, %arg2: memref<8x32xbf16, #tpu.memory_space<vmem>>, %arg3: memref<8x32xbf16, #tpu.memory_space<vmem>>, %arg4: memref<32x32xbf16, #tpu.memory_space<vmem>>, %arg5: memref<1x32xf32, #tpu.memory_space<vmem>>, %arg6: memref<1x32xf32, #tpu.memory_space<vmem>>, %arg7: memref<1x32xf32, #tpu.memory_space<vmem>>, %arg8: memref<32x128xbf16, #tpu.memory_space<vmem>>, %arg9: memref<1x128xf32, #tpu.memory_space<vmem>>, %arg10: memref<128x32xbf16, #tpu.memory_space<vmem>>, %arg11: memref<1x32xf32, #tpu.memory_space<vmem>>, %arg12: memref<1x32xf32, #tpu.memory_space<vmem>>, %arg13: memref<1x32xf32, #tpu.memory_space<vmem>>, %arg14: memref<8x32xf32, #tpu.memory_space<vmem>>, %arg15: memref<8x32xf32, #tpu.memory_space<vmem>>, %arg16: memref<8x32xbf16, #tpu.memory_space<vmem>>) attributes {dimension_semantics = [#tpu.dimension_semantics<parallel>, #tpu.dimension_semantics<arbitrary>], iteration_bounds = array<i64: 1, 1>, scalar_prefetch = 0 : i64, scratch_operands = 2 : i64, tpu.core_type = #tpu.core_type<tc>, window_params = [{transform_indices = @transform_0, window_bounds = array<i64: 8, 32>}, {transform_indices = @transform_1, window_bounds = array<i64: 8, 32>}, {pipeline_mode = #tpu.pipeline_mode<synchronous>, transform_indices = @transform_2, window_bounds = array<i64: 32, 32>}, {pipeline_mode = #tpu.pipeline_mode<synchronous>, transform_indices = @transform_3, window_bounds = array<i64: 1, 32>}, {pipeline_mode = #tpu.pipeline_mode<synchronous>, transform_indices = @transform_4, window_bounds = array<i64: 1, 32>}, {pipeline_mode = #tpu.pipeline_mode<synchronous>, transform_indices = @transform_5, window_bounds = array<i64: 1, 32>}, {transform_indices = @transform_6, window_bounds = array<i64: 32, 128>}, {transform_indices = @transform_7, window_bounds = array<i64: 1, 128>}, {transform_indices = @transform_8, window_bounds = array<i64: 128, 32>}, {pipeline_mode = #tpu.pipeline_mode<synchronous>, transform_indices = @transform_9, window_bounds = array<i64: 1, 32>}, {pipeline_mode = #tpu.pipeline_mode<synchronous>, transform_indices = @transform_10, window_bounds = array<i64: 1, 32>}, {pipeline_mode = #tpu.pipeline_mode<synchronous>, transform_indices = @transform_11, window_bounds = array<i64: 1, 32>}, {transform_indices = @transform_12, window_bounds = array<i64: 8, 32>}]} {
    %c0_i32 = arith.constant 0 : i32
    %0 = arith.cmpi eq, %arg1, %c0_i32 : i32
    %1 = arith.extui %0 : i1 to i32
    %c0_i32_0 = arith.constant 0 : i32
    %2 = arith.cmpi ne, %1, %c0_i32_0 : i32
    scf.if %2 {
      %c0_18 = arith.constant 0 : index
      %c0_19 = arith.constant 0 : index
      %29 = vector.load %arg2[%c0_18, %c0_19] : memref<8x32xbf16, #tpu.memory_space<vmem>>, vector<8x32xbf16>
      %30 = arith.extf %29 : vector<8x32xbf16> to vector<8x32xf32>
      %c0_20 = arith.constant 0 : index
      %c0_21 = arith.constant 0 : index
      %31 = vector.load %arg3[%c0_20, %c0_21] : memref<8x32xbf16, #tpu.memory_space<vmem>>, vector<8x32xbf16>
      %c0_22 = arith.constant 0 : index
      %c0_23 = arith.constant 0 : index
      %32 = vector.load %arg4[%c0_22, %c0_23] : memref<32x32xbf16, #tpu.memory_space<vmem>>, vector<32x32xbf16>
      %cst_24 = arith.constant dense<0.000000e+00> : vector<8x32xf32>
      %33 = tpu.matmul %31, %32, %cst_24 {dimension_numbers = #tpu.dot_dimension_numbers<[1], [0], [0], [1], [0, 0, 1, 1], [], []>} : vector<8x32xbf16>, vector<32x32xbf16>, vector<8x32xf32> -> vector<8x32xf32>
      %c0_25 = arith.constant 0 : index
      %c0_26 = arith.constant 0 : index
      %34 = vector.load %arg5[%c0_25, %c0_26] : memref<1x32xf32, #tpu.memory_space<vmem>>, vector<1x32xf32>
      %35 = vector.broadcast %34 : vector<1x32xf32> to vector<8x32xf32>
      %36 = arith.addf %33, %35 : vector<8x32xf32>
      %37 = arith.addf %30, %36 : vector<8x32xf32>
      %c0_27 = arith.constant 0 : index
      %c0_28 = arith.constant 0 : index
      %38 = vector.load %arg6[%c0_27, %c0_28] : memref<1x32xf32, #tpu.memory_space<vmem>>, vector<1x32xf32>
      %c0_29 = arith.constant 0 : index
      %c0_30 = arith.constant 0 : index
      %39 = vector.load %arg7[%c0_29, %c0_30] : memref<1x32xf32, #tpu.memory_space<vmem>>, vector<1x32xf32>
      %cst_31 = arith.constant dense<0.000000e+00> : vector<8xf32>
      %40 = vector.multi_reduction <add>, %37, %cst_31 [1] : vector<8x32xf32> to vector<8xf32>
      %41 = vector.shape_cast %40 : vector<8xf32> to vector<8x1xf32>
      %cst_32 = arith.constant 3.200000e+01 : f32
      %42 = vector.broadcast %cst_32 : f32 to vector<8x1xf32>
      %43 = arith.divf %41, %42 : vector<8x1xf32>
      %44 = vector.broadcast %43 : vector<8x1xf32> to vector<8x32xf32>
      %45 = arith.subf %37, %44 : vector<8x32xf32>
      %46 = arith.mulf %45, %45 : vector<8x32xf32>
      %cst_33 = arith.constant dense<0.000000e+00> : vector<8xf32>
      %47 = vector.multi_reduction <add>, %46, %cst_33 [1] : vector<8x32xf32> to vector<8xf32>
      %48 = vector.shape_cast %47 : vector<8xf32> to vector<8x1xf32>
      %cst_34 = arith.constant 3.200000e+01 : f32
      %49 = vector.broadcast %cst_34 : f32 to vector<8x1xf32>
      %50 = arith.divf %48, %49 : vector<8x1xf32>
      %51 = vector.broadcast %43 : vector<8x1xf32> to vector<8x32xf32>
      %52 = arith.subf %37, %51 : vector<8x32xf32>
      %cst_35 = arith.constant 9.99999974E-6 : f32
      %53 = vector.broadcast %cst_35 : f32 to vector<8x1xf32>
      %54 = arith.addf %50, %53 : vector<8x1xf32>
      %55 = math.rsqrt %54 : vector<8x1xf32>
      %56 = vector.broadcast %55 : vector<8x1xf32> to vector<8x32xf32>
      %57 = arith.mulf %52, %56 : vector<8x32xf32>
      %58 = vector.broadcast %38 : vector<1x32xf32> to vector<8x32xf32>
      %59 = arith.mulf %57, %58 : vector<8x32xf32>
      %60 = vector.broadcast %39 : vector<1x32xf32> to vector<8x32xf32>
      %61 = arith.addf %59, %60 : vector<8x32xf32>
      %c0_36 = arith.constant 0 : index
      %c0_37 = arith.constant 0 : index
      %62 = vector.load %arg15[%c0_36, %c0_37] : memref<8x32xf32, #tpu.memory_space<vmem>>, vector<8x32xf32>
      tpu.vector_store %arg15[%c0_36, %c0_37], %61 {strides = array<i32>} : memref<8x32xf32, #tpu.memory_space<vmem>>, vector<8x32xf32>,
      %63 = arith.truncf %61 : vector<8x32xf32> to vector<8x32xbf16>
      %c0_38 = arith.constant 0 : index
      %c0_39 = arith.constant 0 : index
      %64 = vector.load %arg16[%c0_38, %c0_39] : memref<8x32xbf16, #tpu.memory_space<vmem>>, vector<8x32xbf16>
      tpu.vector_store %arg16[%c0_38, %c0_39], %63 {strides = array<i32>} : memref<8x32xbf16, #tpu.memory_space<vmem>>, vector<8x32xbf16>,
    } else {
    }
    %c0 = arith.constant 0 : index
    %c0_1 = arith.constant 0 : index
    %3 = vector.load %arg16[%c0, %c0_1] : memref<8x32xbf16, #tpu.memory_space<vmem>>, vector<8x32xbf16>
    %c0_2 = arith.constant 0 : index
    %c0_3 = arith.constant 0 : index
    %4 = vector.load %arg8[%c0_2, %c0_3] : memref<32x128xbf16, #tpu.memory_space<vmem>>, vector<32x128xbf16>
    %cst = arith.constant dense<0.000000e+00> : vector<8x128xf32>
    %5 = tpu.matmul %3, %4, %cst {dimension_numbers = #tpu.dot_dimension_numbers<[1], [0], [0], [1], [0, 0, 1, 1], [], []>} : vector<8x32xbf16>, vector<32x128xbf16>, vector<8x128xf32> -> vector<8x128xf32>
    %c0_4 = arith.constant 0 : index
    %c0_5 = arith.constant 0 : index
    %6 = vector.load %arg9[%c0_4, %c0_5] : memref<1x128xf32, #tpu.memory_space<vmem>>, vector<1x128xf32>
    %7 = vector.broadcast %6 : vector<1x128xf32> to vector<8x128xf32>
    %8 = arith.addf %5, %7 : vector<8x128xf32>
    %cst_6 = arith.constant 5.000000e-01 : f32
    %9 = vector.broadcast %cst_6 : f32 to vector<8x128xf32>
    %10 = arith.mulf %9, %8 : vector<8x128xf32>
    %cst_7 = arith.constant 0.707106769 : f32
    %11 = vector.broadcast %cst_7 : f32 to vector<8x128xf32>
    %12 = arith.mulf %8, %11 : vector<8x128xf32>
    %13 = math.erf %12 : vector<8x128xf32>
    %cst_8 = arith.constant 1.000000e+00 : f32
    %14 = vector.broadcast %cst_8 : f32 to vector<8x128xf32>
    %15 = arith.addf %14, %13 : vector<8x128xf32>
    %16 = arith.mulf %10, %15 : vector<8x128xf32>
    %17 = arith.truncf %16 : vector<8x128xf32> to vector<8x128xbf16>
    %c0_9 = arith.constant 0 : index
    %c0_10 = arith.constant 0 : index
    %18 = vector.load %arg10[%c0_9, %c0_10] : memref<128x32xbf16, #tpu.memory_space<vmem>>, vector<128x32xbf16>
    %cst_11 = arith.constant dense<0.000000e+00> : vector<8x32xf32>
    %19 = tpu.matmul %17, %18, %cst_11 {dimension_numbers = #tpu.dot_dimension_numbers<[1], [0], [0], [1], [0, 0, 1, 1], [], []>} : vector<8x128xbf16>, vector<128x32xbf16>, vector<8x32xf32> -> vector<8x32xf32>
    %c0_i32_12 = arith.constant 0 : i32
    %20 = arith.cmpi eq, %arg1, %c0_i32_12 : i32
    %21 = arith.extui %20 : i1 to i32
    %c0_i32_13 = arith.constant 0 : i32
    %22 = arith.cmpi ne, %21, %c0_i32_13 : i32
    scf.if %22 {
      %c0_18 = arith.constant 0 : index
      %c0_19 = arith.constant 0 : index
      %29 = vector.load %arg14[%c0_18, %c0_19] : memref<8x32xf32, #tpu.memory_space<vmem>>, vector<8x32xf32>
      tpu.vector_store %arg14[%c0_18, %c0_19], %19 {strides = array<i32>} : memref<8x32xf32, #tpu.memory_space<vmem>>, vector<8x32xf32>,
    } else {
    }
    %c0_i32_14 = arith.constant 0 : i32
    %23 = arith.cmpi ne, %arg1, %c0_i32_14 : i32
    %24 = arith.extui %23 : i1 to i32
    %c0_i32_15 = arith.constant 0 : i32
    %25 = arith.cmpi ne, %24, %c0_i32_15 : i32
    scf.if %25 {
      %c0_18 = arith.constant 0 : index
      %c0_19 = arith.constant 0 : index
      %29 = vector.load %arg14[%c0_18, %c0_19] : memref<8x32xf32, #tpu.memory_space<vmem>>, vector<8x32xf32>
      %30 = arith.addf %29, %19 : vector<8x32xf32>
      %c0_20 = arith.constant 0 : index
      %c0_21 = arith.constant 0 : index
      %31 = vector.load %arg14[%c0_20, %c0_21] : memref<8x32xf32, #tpu.memory_space<vmem>>, vector<8x32xf32>
      tpu.vector_store %arg14[%c0_20, %c0_21], %30 {strides = array<i32>} : memref<8x32xf32, #tpu.memory_space<vmem>>, vector<8x32xf32>,
    } else {
    }
    %c0_i32_16 = arith.constant 0 : i32
    %26 = arith.cmpi eq, %arg1, %c0_i32_16 : i32
    %27 = arith.extui %26 : i1 to i32
    %c0_i32_17 = arith.constant 0 : i32
    %28 = arith.cmpi ne, %27, %c0_i32_17 : i32
    scf.if %28 {
      %c0_18 = arith.constant 0 : index
      %c0_19 = arith.constant 0 : index
      %29 = vector.load %arg14[%c0_18, %c0_19] : memref<8x32xf32, #tpu.memory_space<vmem>>, vector<8x32xf32>
      %c0_20 = arith.constant 0 : index
      %c0_21 = arith.constant 0 : index
      %30 = vector.load %arg11[%c0_20, %c0_21] : memref<1x32xf32, #tpu.memory_space<vmem>>, vector<1x32xf32>
      %31 = vector.broadcast %30 : vector<1x32xf32> to vector<8x32xf32>
      %32 = arith.addf %29, %31 : vector<8x32xf32>
      %c0_22 = arith.constant 0 : index
      %c0_23 = arith.constant 0 : index
      %33 = vector.load %arg15[%c0_22, %c0_23] : memref<8x32xf32, #tpu.memory_space<vmem>>, vector<8x32xf32>
      %34 = arith.addf %33, %32 : vector<8x32xf32>
      %c0_24 = arith.constant 0 : index
      %c0_25 = arith.constant 0 : index
      %35 = vector.load %arg12[%c0_24, %c0_25] : memref<1x32xf32, #tpu.memory_space<vmem>>, vector<1x32xf32>
      %c0_26 = arith.constant 0 : index
      %c0_27 = arith.constant 0 : index
      %36 = vector.load %arg13[%c0_26, %c0_27] : memref<1x32xf32, #tpu.memory_space<vmem>>, vector<1x32xf32>
      %cst_28 = arith.constant dense<0.000000e+00> : vector<8xf32>
      %37 = vector.multi_reduction <add>, %34, %cst_28 [1] : vector<8x32xf32> to vector<8xf32>
      %38 = vector.shape_cast %37 : vector<8xf32> to vector<8x1xf32>
      %cst_29 = arith.constant 3.200000e+01 : f32
      %39 = vector.broadcast %cst_29 : f32 to vector<8x1xf32>
      %40 = arith.divf %38, %39 : vector<8x1xf32>
      %41 = vector.broadcast %40 : vector<8x1xf32> to vector<8x32xf32>
      %42 = arith.subf %34, %41 : vector<8x32xf32>
      %43 = arith.mulf %42, %42 : vector<8x32xf32>
      %cst_30 = arith.constant dense<0.000000e+00> : vector<8xf32>
      %44 = vector.multi_reduction <add>, %43, %cst_30 [1] : vector<8x32xf32> to vector<8xf32>
      %45 = vector.shape_cast %44 : vector<8xf32> to vector<8x1xf32>
      %cst_31 = arith.constant 3.200000e+01 : f32
      %46 = vector.broadcast %cst_31 : f32 to vector<8x1xf32>
      %47 = arith.divf %45, %46 : vector<8x1xf32>
      %48 = vector.broadcast %40 : vector<8x1xf32> to vector<8x32xf32>
      %49 = arith.subf %34, %48 : vector<8x32xf32>
      %cst_32 = arith.constant 9.99999974E-6 : f32
      %50 = vector.broadcast %cst_32 : f32 to vector<8x1xf32>
      %51 = arith.addf %47, %50 : vector<8x1xf32>
      %52 = math.rsqrt %51 : vector<8x1xf32>
      %53 = vector.broadcast %52 : vector<8x1xf32> to vector<8x32xf32>
      %54 = arith.mulf %49, %53 : vector<8x32xf32>
      %55 = vector.broadcast %35 : vector<1x32xf32> to vector<8x32xf32>
      %56 = arith.mulf %54, %55 : vector<8x32xf32>
      %57 = vector.broadcast %36 : vector<1x32xf32> to vector<8x32xf32>
      %58 = arith.addf %56, %57 : vector<8x32xf32>
      %c0_33 = arith.constant 0 : index
      %c0_34 = arith.constant 0 : index
      %59 = vector.load %arg14[%c0_33, %c0_34] : memref<8x32xf32, #tpu.memory_space<vmem>>, vector<8x32xf32>
      tpu.vector_store %arg14[%c0_33, %c0_34], %58 {strides = array<i32>} : memref<8x32xf32, #tpu.memory_space<vmem>>, vector<8x32xf32>,
    } else {
    }
    return
  }
  func.func @transform_0(%arg0: i32, %arg1: i32) -> (i32, i32) {
    %c0_i32 = arith.constant 0 : i32
    %c0_i32_0 = arith.constant 0 : i32
    return %arg0, %c0_i32 : i32, i32
  }
  func.func @transform_1(%arg0: i32, %arg1: i32) -> (i32, i32) {
    %c0_i32 = arith.constant 0 : i32
    %c0_i32_0 = arith.constant 0 : i32
    return %arg0, %c0_i32 : i32, i32
  }
  func.func @transform_2(%arg0: i32, %arg1: i32) -> (i32, i32) {
    %c0_i32 = arith.constant 0 : i32
    %c0_i32_0 = arith.constant 0 : i32
    %c0_i32_1 = arith.constant 0 : i32
    return %c0_i32, %c0_i32_0 : i32, i32
  }
  func.func @transform_3(%arg0: i32, %arg1: i32) -> (i32, i32) {
    %c0_i32 = arith.constant 0 : i32
    %c0_i32_0 = arith.constant 0 : i32
    %c0_i32_1 = arith.constant 0 : i32
    return %c0_i32, %c0_i32_0 : i32, i32
  }
  func.func @transform_4(%arg0: i32, %arg1: i32) -> (i32, i32) {
    %c0_i32 = arith.constant 0 : i32
    %c0_i32_0 = arith.constant 0 : i32
    %c0_i32_1 = arith.constant 0 : i32
    return %c0_i32, %c0_i32_0 : i32, i32
  }
  func.func @transform_5(%arg0: i32, %arg1: i32) -> (i32, i32) {
    %c0_i32 = arith.constant 0 : i32
    %c0_i32_0 = arith.constant 0 : i32
    %c0_i32_1 = arith.constant 0 : i32
    return %c0_i32, %c0_i32_0 : i32, i32
  }
  func.func @transform_6(%arg0: i32, %arg1: i32) -> (i32, i32) {
    %c0_i32 = arith.constant 0 : i32
    %c0_i32_0 = arith.constant 0 : i32
    return %c0_i32, %arg1 : i32, i32
  }
  func.func @transform_7(%arg0: i32, %arg1: i32) -> (i32, i32) {
    %c0_i32 = arith.constant 0 : i32
    %c0_i32_0 = arith.constant 0 : i32
    return %c0_i32, %arg1 : i32, i32
  }
  func.func @transform_8(%arg0: i32, %arg1: i32) -> (i32, i32) {
    %c0_i32 = arith.constant 0 : i32
    %c0_i32_0 = arith.constant 0 : i32
    return %arg1, %c0_i32 : i32, i32
  }
  func.func @transform_9(%arg0: i32, %arg1: i32) -> (i32, i32) {
    %c0_i32 = arith.constant 0 : i32
    %c0_i32_0 = arith.constant 0 : i32
    %c0_i32_1 = arith.constant 0 : i32
    return %c0_i32, %c0_i32_0 : i32, i32
  }
  func.func @transform_10(%arg0: i32, %arg1: i32) -> (i32, i32) {
    %c0_i32 = arith.constant 0 : i32
    %c0_i32_0 = arith.constant 0 : i32
    %c0_i32_1 = arith.constant 0 : i32
    return %c0_i32, %c0_i32_0 : i32, i32
  }
  func.func @transform_11(%arg0: i32, %arg1: i32) -> (i32, i32) {
    %c0_i32 = arith.constant 0 : i32
    %c0_i32_0 = arith.constant 0 : i32
    %c0_i32_1 = arith.constant 0 : i32
    return %c0_i32, %c0_i32_0 : i32, i32
  }
  func.func @transform_12(%arg0: i32, %arg1: i32) -> (i32, i32) {
    %c0_i32 = arith.constant 0 : i32
    %c0_i32_0 = arith.constant 0 : i32
    return %arg0, %c0_i32 : i32, i32
  }
}

</mosaic_0001>

<llo_original>
// kernel: tpu_custom_call.1
$region0: #{tpu_custom_call.1}
  #allocation0 [shape = 'u32[]', space=smem, size = 0x4, offset = 0x4, fixed_abs, tag = 'smem constant byte address 0x4 - core index']
  #allocation1 [shape = 'u32[144,128]{1,0:T(1,128)}', space=vmem, size = 0x12000, scoped, tag = 'internal scratch']
  #allocation2 [shape = 'f32[8,32]{1,0:T(8,128)}', space=vmem, size = 0x1000, scoped, tag = 'scratch operand']
  #allocation3 [shape = 'bf16[8,32]{1,0:T(8,128)(2,1)}', space=vmem, size = 0x800, scoped, tag = 'scratch operand']
  %s0 = inlined_call_operand.vmem [shape: bf16[8,32], index: 0, kind: input, shape index: {}]
  %s1 = inlined_call_operand.vmem [shape: bf16[8,32], index: 1, kind: input, shape index: {}]
  %s2 = inlined_call_operand.vmem [shape: bf16[32,32], index: 2, kind: input, shape index: {}]
  %s3 = inlined_call_operand.vmem [shape: f32[1,32], index: 3, kind: input, shape index: {}]
  %s4 = inlined_call_operand.vmem [shape: f32[1,32], index: 4, kind: input, shape index: {}]
  %s5 = inlined_call_operand.vmem [shape: f32[1,32], index: 5, kind: input, shape index: {}]
  %s6 = inlined_call_operand.vmem [shape: bf16[32,128], index: 6, kind: input, shape index: {}]
  %s7 = inlined_call_operand.vmem [shape: f32[1,128], index: 7, kind: input, shape index: {}]
  %s8 = inlined_call_operand.vmem [shape: bf16[128,32], index: 8, kind: input, shape index: {}]
  %s9 = inlined_call_operand.vmem [shape: f32[1,32], index: 9, kind: input, shape index: {}]
  %s10 = inlined_call_operand.vmem [shape: f32[1,32], index: 10, kind: input, shape index: {}]
  %s11 = inlined_call_operand.vmem [shape: f32[1,32], index: 11, kind: input, shape index: {}]
  %s12 = inlined_call_operand.hbm [shape: f32[8,32], index: 12, kind: output, shape index: {}]
  %s13 = sld [smem:[#allocation0]]
  $region74: #{tpu_custom_call.1} parent=0
    _
  %s15 = ssub.s32 1, %s13
  %s16 = scalar_select 0, %s15, %s13
  $region1: #{tpu_custom_call.1} parent=0
    #allocation4 [shape = 'u8[4096]{0}', space=vmem, size = 0x1000, scoped, tag = 'output window, operand 0, single buffered']
    #allocation5 [shape = 's32[1]{0}', space=sflag, size = 0x4, scoped, tag = 'scoped memory for tpu_custom_call.1']
    %17 = vsyncpa [#allocation5], 0
    // Predicated region
    $region2: #{tpu_custom_call.1} parent=1 // pred_check
      _
    $region3: #{tpu_custom_call.1} parent=1 // pred_check_branch
      %19 = sbr.rel (0) target = $region5
    $region4: #{tpu_custom_call.1} parent=1 // pred_region
      _
    $region5: #{tpu_custom_call.1} parent=1 // pred_fallthru
      _
    // Predicated region
    $region6: #{tpu_custom_call.1} parent=1 // pred_check
      _
    $region7: #{tpu_custom_call.1} parent=1 // pred_check_branch
      %21 = sbr.rel (0) target = $region9
    $region8: #{tpu_custom_call.1} parent=1 // pred_region
      _
    $region9: #{tpu_custom_call.1} parent=1 // pred_fallthru
      _
    // Predicated region
    $region10: #{tpu_custom_call.1} parent=1 // pred_check
      _
    $region11: #{tpu_custom_call.1} parent=1 // pred_check_branch
      %23 = sbr.rel (0) target = $region13
    $region12: #{tpu_custom_call.1} parent=1 // pred_region
      _
    $region13: #{tpu_custom_call.1} parent=1 // pred_fallthru
      _
    // Predicated region
    $region14: #{tpu_custom_call.1} parent=1 // pred_check
      _
    $region15: #{tpu_custom_call.1} parent=1 // pred_check_branch
      %25 = sbr.rel (0) target = $region17
    $region16: #{tpu_custom_call.1} parent=1 // pred_region
      _
    $region17: #{tpu_custom_call.1} parent=1 // pred_fallthru
      _
    // Predicated region
    $region18: #{tpu_custom_call.1} parent=1 // pred_check
      _
    $region19: #{tpu_custom_call.1} parent=1 // pred_check_branch
      %27 = sbr.rel (0) target = $region21
    $region20: #{tpu_custom_call.1} parent=1 // pred_region
      _
    $region21: #{tpu_custom_call.1} parent=1 // pred_fallthru
      _
    // Predicated region
    $region22: #{tpu_custom_call.1} parent=1 // pred_check
      _
    $region23: #{tpu_custom_call.1} parent=1 // pred_check_branch
      %29 = sbr.rel (0) target = $region25
    $region24: #{tpu_custom_call.1} parent=1 // pred_region
      _
    $region25: #{tpu_custom_call.1} parent=1 // pred_fallthru
      _
    // Predicated region
    $region26: #{tpu_custom_call.1} parent=1 // pred_check
      _
    $region27: #{tpu_custom_call.1} parent=1 // pred_check_branch
      %31 = sbr.rel (0) target = $region29
    $region28: #{tpu_custom_call.1} parent=1 // pred_region
      _
    $region29: #{tpu_custom_call.1} parent=1 // pred_fallthru
      _
    // Predicated region
    $region30: #{tpu_custom_call.1} parent=1 // pred_check
      _
    $region31: #{tpu_custom_call.1} parent=1 // pred_check_branch
      %33 = sbr.rel (0) target = $region33
    $region32: #{tpu_custom_call.1} parent=1 // pred_region
      _
    $region33: #{tpu_custom_call.1} parent=1 // pred_fallthru
      _
    // Predicated region
    $region34: #{tpu_custom_call.1} parent=1 // pred_check
      _
    $region35: #{tpu_custom_call.1} parent=1 // pred_check_branch
      %35 = sbr.rel (0) target = $region37
    $region36: #{tpu_custom_call.1} parent=1 // pred_region
      _
    $region37: #{tpu_custom_call.1} parent=1 // pred_fallthru
      _
    // Predicated region
    $region38: #{tpu_custom_call.1} parent=1 // pred_check
      _
    $region39: #{tpu_custom_call.1} parent=1 // pred_check_branch
      %37 = sbr.rel (0) target = $region41
    $region40: #{tpu_custom_call.1} parent=1 // pred_region
      _
    $region41: #{tpu_custom_call.1} parent=1 // pred_fallthru
      _
    // Predicated region
    $region42: #{tpu_custom_call.1} parent=1 // pred_check
      _
    $region43: #{tpu_custom_call.1} parent=1 // pred_check_branch
      %39 = sbr.rel (0) target = $region45
    $region44: #{tpu_custom_call.1} parent=1 // pred_region
      _
    $region45: #{tpu_custom_call.1} parent=1 // pred_fallthru
      _
    // Predicated region
    $region46: #{tpu_custom_call.1} parent=1 // pred_check
      _
    $region47: #{tpu_custom_call.1} parent=1 // pred_check_branch
      %41 = sbr.rel (0) target = $region49
    $region48: #{tpu_custom_call.1} parent=1 // pred_region
      _
    $region49: #{tpu_custom_call.1} parent=1 // pred_fallthru
      _
    %p43 = scmp.eq.s32.totalorder 0, 0
    // Predicated region
    $region50: #{tpu_custom_call.1} parent=1 // pred_check
      %p44 = pneg %p43
    $region51: #{tpu_custom_call.1} parent=1 // pred_check_branch
      %46 = sbr.rel (%p44) target = $region53
    $region52: #{tpu_custom_call.1} parent=1 // pred_region
      %v47 = vld [vmem:[%s0] sm:$0xf]
      %v48 = vunpack.c.l.bf16 %v47
      %v49 = vld [vmem:[%s1] sm:$0xf]
      %v50 = vld [vmem:[%s2] sm:$0xf]
      %v51 = vld [vmem:[%s2 + $0x4] sm:$0xf]
      %v52 = vld [vmem:[%s2 + $0x8] sm:$0xf]
      %v53 = vld [vmem:[%s2 + $0xc] sm:$0xf]
      %v54 = vld [vmem:[%s3] sm:$0x1]
      %v56 = vlaneseq
      %v57 = vshrl.u32 %v56, 7
      %v58 = vsub.s32 0, %v57
      %v59 = vrot.slane %v54, %v58
      %v65 = vunpack.c.l.b16 %v50
      %v66 = vunpack.c.l.b16 %v51
      %v67 = vunpack.c.l.b16 %v52
      %v68 = vunpack.c.l.b16 %v53
      %v69 = vpack.c.b16 %v66, %v65
      %v70 = vpack.c.b16 %v68, %v67
      %vm73 = vcmask 261120
      %v75 = vsel %vm73, %v49, 0
      %77 = vmatprep.subr.bf16.mxu0 0
      %78 = vmatpush1.bf16.msra.mxu0 %v69
      %79 = vmatprep.subr.bf16.mxu0 0
      %80 = vmatpush1.bf16.msra.mxu0 %v70
      %81 = vmatprep.subr.bf16.mxu0 0
      %82 = vmatpush1.bf16.msra.mxu0 0
      %83 = vmatprep.subr.bf16.mxu0 0
      %84 = vmatpush1.bf16.msra.mxu0 0
      %85 = vmatprep.subr.bf16.mxu0 0
      %86 = vmatpush1.bf16.msra.mxu0 0
      %87 = vmatprep.subr.bf16.mxu0 0
      %88 = vmatpush1.bf16.msra.mxu0 0
      %89 = vmatprep.subr.bf16.mxu0 0
      %90 = vmatpush1.bf16.msra.mxu0 0
      %91 = vmatprep.subr.bf16.mxu0 0
      %92 = vmatpush1.bf16.msra.mxu0 0
      %93 = vmatprep.subr.bf16.mxu0 0
      %94 = vmatpush1.bf16.msra.mxu0 0
      %95 = vmatprep.subr.bf16.mxu0 0
      %96 = vmatpush1.bf16.msra.mxu0 0
      %97 = vmatprep.subr.bf16.mxu0 0
      %98 = vmatpush1.bf16.msra.mxu0 0
      %99 = vmatprep.subr.bf16.mxu0 0
      %100 = vmatpush1.bf16.msra.mxu0 0
      %101 = vmatprep.subr.bf16.mxu0 0
      %102 = vmatpush1.bf16.msra.mxu0 0
      %103 = vmatprep.subr.bf16.mxu0 0
      %104 = vmatpush1.bf16.msra.mxu0 0
      %105 = vmatprep.subr.bf16.mxu0 0
      %106 = vmatpush1.bf16.msra.mxu0 0
      %107 = vmatprep.subr.bf16.mxu0 0
      %108 = vmatpush1.bf16.msra.mxu0 0
      %109 = vmatprep.mubr.bf16.mxu0 0
      %110 = vmatmul.mubr.bf16.gmra.mrb[0].mxu0 %v75
      %v111 = vpop.f32.mrb[0].mxu0
      %v112 = vadd.f32 %v59, %v111
      %v113 = vpop.f32.mrb[0].mxu0
      %v114 = vpop.f32.mrb[0].mxu0
      %v115 = vpop.f32.mrb[0].mxu0
      %116 = vdwg.mxu0
      %v117 = vadd.f32 %v48, %v112
      %v118 = vld [vmem:[%s4] sm:$0x1]
      %v119 = vld [vmem:[%s5] sm:$0x1]
      %v120 = vsel %vm73, %v117, 0.0
      %121 = vadd.xlane.f32.xlu0 %v120
      %v122 = vpop.xlane.xlu0 %121
      %v123 = vrcp.pop 32.0
      %v124 = vmul.f32 %v122, %v123
      %v125 = vsub.f32 %v117, %v124
      %v126 = vmul.f32 %v125, %v125
      %v127 = vsel %vm73, %v126, 0.0
      %128 = vadd.xlane.f32.xlu0 %v127
      %v129 = vpop.xlane.xlu0 %128
      %v130 = vmul.f32 %v129, %v123
      %v131 = vadd.f32 %v130, 1e-05
      %v132 = vrsqrt.pop %v131
      %v133 = vmul.f32 %v125, %v132
      %v135 = vlaneseq
      %v136 = vshrl.u32 %v135, 7
      %v137 = vsub.s32 0, %v136
      %v138 = vrot.slane %v118, %v137
      %v140 = vmul.f32 %v133, %v138
      %v142 = vlaneseq
      %v143 = vshrl.u32 %v142, 7
      %v144 = vsub.s32 0, %v143
      %v145 = vrot.slane %v119, %v144
      %v147 = vadd.f32 %v140, %v145
      %148 = vst.msk [vmem:[#allocation2] sm:$0xff] %vm73, %v147
      %v149 = vpack.c.bf16 %v147, %v147
      %vm150 = vcmask 257024
      %151 = vst.msk [vmem:[#allocation3] sm:$0xf] %vm150, %v149
    $region53: #{tpu_custom_call.1} parent=1 // pred_fallthru
      _
    %v152 = vld [vmem:[#allocation3] sm:$0xf]
    %v153 = vld [vmem:[%s6] sm:$0xf]
    %v154 = vld [vmem:[%s6 + $0x4] sm:$0xf]
    %v155 = vld [vmem:[%s6 + $0x8] sm:$0xf]
    %v156 = vld [vmem:[%s6 + $0xc] sm:$0xf]
    %v157 = vld [vmem:[%s7] sm:$0x1]
    %v159 = vlaneseq
    %v160 = vshrl.u32 %v159, 7
    %v161 = vsub.s32 0, %v160
    %v162 = vrot.slane %v157, %v161
    %v168 = vunpack.c.l.b16 %v153
    %v169 = vunpack.c.l.b16 %v154
    %v170 = vunpack.c.l.b16 %v155
    %v171 = vunpack.c.l.b16 %v156
    %v172 = vpack.c.b16 %v169, %v168
    %v173 = vpack.c.b16 %v171, %v170
    %vm176 = vcmask 261120
    %v178 = vsel %vm176, %v152, 0
    %180 = vmatprep.subr.bf16.mxu0 0
    %181 = vmatpush1.bf16.msra.mxu0 %v172
    %182 = vmatprep.subr.bf16.mxu0 0
    %183 = vmatpush1.bf16.msra.mxu0 %v173
    %184 = vmatprep.subr.bf16.mxu0 0
    %185 = vmatpush1.bf16.msra.mxu0 0
    %186 = vmatprep.subr.bf16.mxu0 0
    %187 = vmatpush1.bf16.msra.mxu0 0
    %188 = vmatprep.subr.bf16.mxu0 0
    %189 = vmatpush1.bf16.msra.mxu0 0
    %190 = vmatprep.subr.bf16.mxu0 0
    %191 = vmatpush1.bf16.msra.mxu0 0
    %192 = vmatprep.subr.bf16.mxu0 0
    %193 = vmatpush1.bf16.msra.mxu0 0
    %194 = vmatprep.subr.bf16.mxu0 0
    %195 = vmatpush1.bf16.msra.mxu0 0
    %196 = vmatprep.subr.bf16.mxu0 0
    %197 = vmatpush1.bf16.msra.mxu0 0
    %198 = vmatprep.subr.bf16.mxu0 0
    %199 = vmatpush1.bf16.msra.mxu0 0
    %200 = vmatprep.subr.bf16.mxu0 0
    %201 = vmatpush1.bf16.msra.mxu0 0
    %202 = vmatprep.subr.bf16.mxu0 0
    %203 = vmatpush1.bf16.msra.mxu0 0
    %204 = vmatprep.subr.bf16.mxu0 0
    %205 = vmatpush1.bf16.msra.mxu0 0
    %206 = vmatprep.subr.bf16.mxu0 0
    %207 = vmatpush1.bf16.msra.mxu0 0
    %208 = vmatprep.subr.bf16.mxu0 0
    %209 = vmatpush1.bf16.msra.mxu0 0
    %210 = vmatprep.subr.bf16.mxu0 0
    %211 = vmatpush1.bf16.msra.mxu0 0
    %212 = vmatprep.mubr.bf16.mxu0 0
    %213 = vmatmul.mubr.bf16.gmra.mrb[0].mxu0 %v178
    %v214 = vpop.f32.mrb[0].mxu0
    %v215 = vadd.f32 %v162, %v214
    %v216 = vpop.f32.mrb[0].mxu0
    %v217 = vpop.f32.mrb[0].mxu0
    %v218 = vpop.f32.mrb[0].mxu0
    %219 = vdwg.mxu0
    %v220 = vmul.f32 %v215, 0.5
    %v221 = vmul.f32 %v215, 0.70710677
    %v222 = verf.f32.pop %v221
    %v223 = vadd.f32 %v222, 1.0
    %v224 = vmul.f32 %v220, %v223
    %v225 = vpack.c.bf16 %v224, %v224
    %v226 = vld [vmem:[%s8] sm:$0xf]
    %v227 = vld [vmem:[%s8 + $0x4] sm:$0xf]
    %v228 = vld [vmem:[%s8 + $0x8] sm:$0xf]
    %v229 = vld [vmem:[%s8 + $0xc] sm:$0xf]
    %v230 = vld [vmem:[%s8 + $0x10] sm:$0xf]
    %v231 = vld [vmem:[%s8 + $0x14] sm:$0xf]
    %v232 = vld [vmem:[%s8 + $0x18] sm:$0xf]
    %v233 = vld [vmem:[%s8 + $0x1c] sm:$0xf]
    %v234 = vld [vmem:[%s8 + $0x20] sm:$0xf]
    %v235 = vld [vmem:[%s8 + $0x24] sm:$0xf]
    %v236 = vld [vmem:[%s8 + $0x28] sm:$0xf]
    %v237 = vld [vmem:[%s8 + $0x2c] sm:$0xf]
    %v238 = vld [vmem:[%s8 + $0x30] sm:$0xf]
    %v239 = vld [vmem:[%s8 + $0x34] sm:$0xf]
    %v240 = vld [vmem:[%s8 + $0x38] sm:$0xf]
    %v241 = vld [vmem:[%s8 + $0x3c] sm:$0xf]
    %v258 = vunpack.c.l.b16 %v226
    %v259 = vunpack.c.l.b16 %v227
    %v260 = vunpack.c.l.b16 %v228
    %v261 = vunpack.c.l.b16 %v229
    %v262 = vunpack.c.l.b16 %v230
    %v263 = vunpack.c.l.b16 %v231
    %v264 = vunpack.c.l.b16 %v232
    %v265 = vunpack.c.l.b16 %v233
    %v266 = vunpack.c.l.b16 %v234
    %v267 = vunpack.c.l.b16 %v235
    %v268 = vunpack.c.l.b16 %v236
    %v269 = vunpack.c.l.b16 %v237
    %v270 = vunpack.c.l.b16 %v238
    %v271 = vunpack.c.l.b16 %v239
    %v272 = vunpack.c.l.b16 %v240
    %v273 = vunpack.c.l.b16 %v241
    %v274 = vpack.c.b16 %v259, %v258
    %v275 = vpack.c.b16 %v261, %v260
    %v276 = vpack.c.b16 %v263, %v262
    %v277 = vpack.c.b16 %v265, %v264
    %v278 = vpack.c.b16 %v267, %v266
    %v279 = vpack.c.b16 %v269, %v268
    %v280 = vpack.c.b16 %v271, %v270
    %v281 = vpack.c.b16 %v273, %v272
    %290 = vmatprep.subr.bf16.mxu0 0
    %291 = vmatpush1.bf16.msra.mxu0 %v274
    %292 = vmatprep.subr.bf16.mxu0 0
    %293 = vmatpush1.bf16.msra.mxu0 %v275
    %294 = vmatprep.subr.bf16.mxu0 0
    %295 = vmatpush1.bf16.msra.mxu0 %v276
    %296 = vmatprep.subr.bf16.mxu0 0
    %297 = vmatpush1.bf16.msra.mxu0 %v277
    %298 = vmatprep.subr.bf16.mxu0 0
    %299 = vmatpush1.bf16.msra.mxu0 %v278
    %300 = vmatprep.subr.bf16.mxu0 0
    %301 = vmatpush1.bf16.msra.mxu0 %v279
    %302 = vmatprep.subr.bf16.mxu0 0
    %303 = vmatpush1.bf16.msra.mxu0 %v280
    %304 = vmatprep.subr.bf16.mxu0 0
    %305 = vmatpush1.bf16.msra.mxu0 %v281
    %306 = vmatprep.subr.bf16.mxu0 0
    %307 = vmatpush1.bf16.msra.mxu0 0
    %308 = vmatprep.subr.bf16.mxu0 0
    %309 = vmatpush1.bf16.msra.mxu0 0
    %310 = vmatprep.subr.bf16.mxu0 0
    %311 = vmatpush1.bf16.msra.mxu0 0
    %312 = vmatprep.subr.bf16.mxu0 0
    %313 = vmatpush1.bf16.msra.mxu0 0
    %314 = vmatprep.subr.bf16.mxu0 0
    %315 = vmatpush1.bf16.msra.mxu0 0
    %316 = vmatprep.subr.bf16.mxu0 0
    %317 = vmatpush1.bf16.msra.mxu0 0
    %318 = vmatprep.subr.bf16.mxu0 0
    %319 = vmatpush1.bf16.msra.mxu0 0
    %320 = vmatprep.subr.bf16.mxu0 0
    %321 = vmatpush1.bf16.msra.mxu0 0
    %322 = vmatprep.mubr.bf16.mxu0 0
    %323 = vmatmul.mubr.bf16.gmra.mrb[0].mxu0 %v225
    %v324 = vpop.f32.mrb[0].mxu0
    %v325 = vadd.f32 0.0, %v324
    %v326 = vpop.f32.mrb[0].mxu0
    %v327 = vpop.f32.mrb[0].mxu0
    %v328 = vpop.f32.mrb[0].mxu0
    %329 = vdwg.mxu0
    // Predicated region
    $region54: #{tpu_custom_call.1} parent=1 // pred_check
      %p330 = pneg %p43
    $region55: #{tpu_custom_call.1} parent=1 // pred_check_branch
      %332 = sbr.rel (%p330) target = $region57
    $region56: #{tpu_custom_call.1} parent=1 // pred_region
      %333 = vst.msk [vmem:[#allocation4] sm:$0xff] %vm176, %v325
    $region57: #{tpu_custom_call.1} parent=1 // pred_fallthru
      _
    %p334 = scmp.ne.s32.totalorder 0, 0
    // Predicated region
    $region58: #{tpu_custom_call.1} parent=1 // pred_check
      %p335 = pneg %p334
    $region59: #{tpu_custom_call.1} parent=1 // pred_check_branch
      %337 = sbr.rel (%p335) target = $region61
    $region60: #{tpu_custom_call.1} parent=1 // pred_region
      %v338 = vld [vmem:[#allocation4] sm:$0xff]
      %v339 = vadd.f32 %v338, %v325
      %340 = vst.msk [vmem:[#allocation4] sm:$0xff] %vm176, %v339
    $region61: #{tpu_custom_call.1} parent=1 // pred_fallthru
      _
    // Predicated region
    $region62: #{tpu_custom_call.1} parent=1 // pred_check
      %p341 = pneg %p43
    $region63: #{tpu_custom_call.1} parent=1 // pred_check_branch
      %343 = sbr.rel (%p341) target = $region65
    $region64: #{tpu_custom_call.1} parent=1 // pred_region
      %v344 = vld [vmem:[#allocation4] sm:$0xff]
      %v345 = vld [vmem:[%s9] sm:$0x1]
      %v347 = vlaneseq
      %v348 = vshrl.u32 %v347, 7
      %v349 = vsub.s32 0, %v348
      %v350 = vrot.slane %v345, %v349
      %v352 = vadd.f32 %v344, %v350
      %v353 = vld [vmem:[#allocation2] sm:$0xff]
      %v354 = vadd.f32 %v353, %v352
      %v355 = vld [vmem:[%s10] sm:$0x1]
      %v356 = vld [vmem:[%s11] sm:$0x1]
      %v357 = vsel %vm176, %v354, 0.0
      %358 = vadd.xlane.f32.xlu0 %v357
      %v359 = vpop.xlane.xlu0 %358
      %v360 = vrcp.pop 32.0
      %v361 = vmul.f32 %v359, %v360
      %v362 = vsub.f32 %v354, %v361
      %v363 = vmul.f32 %v362, %v362
      %v364 = vsel %vm176, %v363, 0.0
      %365 = vadd.xlane.f32.xlu0 %v364
      %v366 = vpop.xlane.xlu0 %365
      %v367 = vmul.f32 %v366, %v360
      %v368 = vadd.f32 %v367, 1e-05
      %v369 = vrsqrt.pop %v368
      %v370 = vmul.f32 %v362, %v369
      %v372 = vlaneseq
      %v373 = vshrl.u32 %v372, 7
      %v374 = vsub.s32 0, %v373
      %v375 = vrot.slane %v355, %v374
      %v377 = vmul.f32 %v370, %v375
      %v379 = vlaneseq
      %v380 = vshrl.u32 %v379, 7
      %v381 = vsub.s32 0, %v380
      %v382 = vrot.slane %v356, %v381
      %v384 = vadd.f32 %v377, %v382
      %385 = vst.msk [vmem:[#allocation4] sm:$0xff] %vm176, %v384
    $region65: #{tpu_custom_call.1} parent=1 // pred_fallthru
      _
    // Predicated region
    $region66: #{tpu_custom_call.1} parent=1 // pred_check
      _
    $region67: #{tpu_custom_call.1} parent=1 // pred_check_branch
      %387 = sbr.rel (0) target = $region69
    $region68: #{tpu_custom_call.1} parent=1 // pred_region
      %s389 = ssub.s32 128, 128
      %390 = vsyncadd [#allocation5], %s389
      %s392 = sshll.u32 [#allocation4], 4
      %s393 = int_to_ptr.vmem [resolvable:$true] %s392
      %395 = dma.vmem_to_hbm [thread:$0]  %s393, 128, %s12, [#allocation5]
    $region69: #{tpu_custom_call.1} parent=1 // pred_fallthru
      _
    // Predicated region
    $region70: #{tpu_custom_call.1} parent=1 // pred_check
      _
    $region71: #{tpu_custom_call.1} parent=1 // pred_check_branch
      %397 = sbr.rel (0) target = $region73
    $region72: #{tpu_custom_call.1} parent=1 // pred_region
      %398 = dma.done [#allocation5], 128
    $region73: #{tpu_custom_call.1} parent=1 // pred_fallthru
      _
    %399 = vsyncpa [#allocation5], 1

// kernel: tpu_custom_call.1
$region0: #{tpu_custom_call.1}
  #allocation0 [shape = 'u32[]', space=smem, size = 0x4, offset = 0x4, fixed_abs, tag = 'smem constant byte address 0x4 - core index']
  #allocation1 [shape = 'u32[144,128]{1,0:T(1,128)}', space=vmem, size = 0x12000, scoped, tag = 'internal scratch']
  #allocation2 [shape = 'f32[8,32]{1,0:T(8,128)}', space=vmem, size = 0x1000, scoped, tag = 'scratch operand']
  #allocation3 [shape = 'bf16[8,32]{1,0:T(8,128)(2,1)}', space=vmem, size = 0x800, scoped, tag = 'scratch operand']
  %s0 = inlined_call_operand.vmem [shape: bf16[8,32], index: 0, kind: input, shape index: {}]
  %s1 = inlined_call_operand.vmem [shape: bf16[8,32], index: 1, kind: input, shape index: {}]
  %s2 = inlined_call_operand.vmem [shape: bf16[32,32], index: 2, kind: input, shape index: {}]
  %s3 = inlined_call_operand.vmem [shape: f32[1,32], index: 3, kind: input, shape index: {}]
  %s4 = inlined_call_operand.vmem [shape: f32[1,32], index: 4, kind: input, shape index: {}]
  %s5 = inlined_call_operand.vmem [shape: f32[1,32], index: 5, kind: input, shape index: {}]
  %s6 = inlined_call_operand.vmem [shape: bf16[32,128], index: 6, kind: input, shape index: {}]
  %s7 = inlined_call_operand.vmem [shape: f32[1,128], index: 7, kind: input, shape index: {}]
  %s8 = inlined_call_operand.vmem [shape: bf16[128,32], index: 8, kind: input, shape index: {}]
  %s9 = inlined_call_operand.vmem [shape: f32[1,32], index: 9, kind: input, shape index: {}]
  %s10 = inlined_call_operand.vmem [shape: f32[1,32], index: 10, kind: input, shape index: {}]
  %s11 = inlined_call_operand.vmem [shape: f32[1,32], index: 11, kind: input, shape index: {}]
  %s12 = inlined_call_operand.hbm [shape: f32[8,32], index: 12, kind: output, shape index: {}]
  %s13 = sld [smem:[#allocation0]]
  $region74: #{tpu_custom_call.1} parent=0
    _
  %s15 = ssub.s32 1, %s13
  %s16 = scalar_select 0, %s15, %s13
  $region1: #{tpu_custom_call.1} parent=0
    #allocation4 [shape = 'u8[4096]{0}', space=vmem, size = 0x1000, scoped, tag = 'output window, operand 0, single buffered']
    #allocation5 [shape = 's32[1]{0}', space=sflag, size = 0x4, scoped, tag = 'scoped memory for tpu_custom_call.1']
    %17 = vsyncpa [#allocation5], 0
    // Predicated region
    $region2: #{tpu_custom_call.1} parent=1 // pred_check
      _
    $region3: #{tpu_custom_call.1} parent=1 // pred_check_branch
      %19 = sbr.rel (0) target = $region5
    $region4: #{tpu_custom_call.1} parent=1 // pred_region
      _
    $region5: #{tpu_custom_call.1} parent=1 // pred_fallthru
      _
    // Predicated region
    $region6: #{tpu_custom_call.1} parent=1 // pred_check
      _
    $region7: #{tpu_custom_call.1} parent=1 // pred_check_branch
      %21 = sbr.rel (0) target = $region9
    $region8: #{tpu_custom_call.1} parent=1 // pred_region
      _
    $region9: #{tpu_custom_call.1} parent=1 // pred_fallthru
      _
    // Predicated region
    $region10: #{tpu_custom_call.1} parent=1 // pred_check
      _
    $region11: #{tpu_custom_call.1} parent=1 // pred_check_branch
      %23 = sbr.rel (0) target = $region13
    $region12: #{tpu_custom_call.1} parent=1 // pred_region
      _
    $region13: #{tpu_custom_call.1} parent=1 // pred_fallthru
      _
    // Predicated region
    $region14: #{tpu_custom_call.1} parent=1 // pred_check
      _
    $region15: #{tpu_custom_call.1} parent=1 // pred_check_branch
      %25 = sbr.rel (0) target = $region17
    $region16: #{tpu_custom_call.1} parent=1 // pred_region
      _
    $region17: #{tpu_custom_call.1} parent=1 // pred_fallthru
      _
    // Predicated region
    $region18: #{tpu_custom_call.1} parent=1 // pred_check
      _
    $region19: #{tpu_custom_call.1} parent=1 // pred_check_branch
      %27 = sbr.rel (0) target = $region21
    $region20: #{tpu_custom_call.1} parent=1 // pred_region
      _
    $region21: #{tpu_custom_call.1} parent=1 // pred_fallthru
      _
    // Predicated region
    $region22: #{tpu_custom_call.1} parent=1 // pred_check
      _
    $region23: #{tpu_custom_call.1} parent=1 // pred_check_branch
      %29 = sbr.rel (0) target = $region25
    $region24: #{tpu_custom_call.1} parent=1 // pred_region
      _
    $region25: #{tpu_custom_call.1} parent=1 // pred_fallthru
      _
    // Predicated region
    $region26: #{tpu_custom_call.1} parent=1 // pred_check
      _
    $region27: #{tpu_custom_call.1} parent=1 // pred_check_branch
      %31 = sbr.rel (0) target = $region29
    $region28: #{tpu_custom_call.1} parent=1 // pred_region
      _
    $region29: #{tpu_custom_call.1} parent=1 // pred_fallthru
      _
    // Predicated region
    $region30: #{tpu_custom_call.1} parent=1 // pred_check
      _
    $region31: #{tpu_custom_call.1} parent=1 // pred_check_branch
      %33 = sbr.rel (0) target = $region33
    $region32: #{tpu_custom_call.1} parent=1 // pred_region
      _
    $region33: #{tpu_custom_call.1} parent=1 // pred_fallthru
      _
    // Predicated region
    $region34: #{tpu_custom_call.1} parent=1 // pred_check
      _
    $region35: #{tpu_custom_call.1} parent=1 // pred_check_branch
      %35 = sbr.rel (0) target = $region37
    $region36: #{tpu_custom_call.1} parent=1 // pred_region
      _
    $region37: #{tpu_custom_call.1} parent=1 // pred_fallthru
      _
    // Predicated region
    $region38: #{tpu_custom_call.1} parent=1 // pred_check
      _
    $region39: #{tpu_custom_call.1} parent=1 // pred_check_branch
      %37 = sbr.rel (0) target = $region41
    $region40: #{tpu_custom_call.1} parent=1 // pred_region
      _
    $region41: #{tpu_custom_call.1} parent=1 // pred_fallthru
      _
    // Predicated region
    $region42: #{tpu_custom_call.1} parent=1 // pred_check
      _
    $region43: #{tpu_custom_call.1} parent=1 // pred_check_branch
      %39 = sbr.rel (0) target = $region45
    $region44: #{tpu_custom_call.1} parent=1 // pred_region
      _
    $region45: #{tpu_custom_call.1} parent=1 // pred_fallthru
      _
    // Predicated region
    $region46: #{tpu_custom_call.1} parent=1 // pred_check
      _
    $region47: #{tpu_custom_call.1} parent=1 // pred_check_branch
      %41 = sbr.rel (0) target = $region49
    $region48: #{tpu_custom_call.1} parent=1 // pred_region
      _
    $region49: #{tpu_custom_call.1} parent=1 // pred_fallthru
      _
    %p43 = scmp.eq.s32.totalorder 0, 0
    // Predicated region
    $region50: #{tpu_custom_call.1} parent=1 // pred_check
      %p44 = pneg %p43
    $region51: #{tpu_custom_call.1} parent=1 // pred_check_branch
      %46 = sbr.rel (%p44) target = $region53
    $region52: #{tpu_custom_call.1} parent=1 // pred_region
      %v47 = vld [vmem:[%s0] sm:$0xf]
      %v48 = vunpack.c.l.bf16 %v47
      %v49 = vld [vmem:[%s1] sm:$0xf]
      %v50 = vld [vmem:[%s2] sm:$0xf]
      %v51 = vld [vmem:[%s2 + $0x4] sm:$0xf]
      %v52 = vld [vmem:[%s2 + $0x8] sm:$0xf]
      %v53 = vld [vmem:[%s2 + $0xc] sm:$0xf]
      %v54 = vld [vmem:[%s3] sm:$0x1]
      %v56 = vlaneseq
      %v57 = vshrl.u32 %v56, 7
      %v58 = vsub.s32 0, %v57
      %v59 = vrot.slane %v54, %v58
      %v65 = vunpack.c.l.b16 %v50
      %v66 = vunpack.c.l.b16 %v51
      %v67 = vunpack.c.l.b16 %v52
      %v68 = vunpack.c.l.b16 %v53
      %v69 = vpack.c.b16 %v66, %v65
      %v70 = vpack.c.b16 %v68, %v67
      %vm73 = vcmask 261120
      %v75 = vsel %vm73, %v49, 0
      %77 = vmatprep.subr.bf16.mxu0 0
      %78 = vmatpush1.bf16.msra.mxu0 %v69
      %79 = vmatprep.subr.bf16.mxu0 0
      %80 = vmatpush1.bf16.msra.mxu0 %v70
      %81 = vmatprep.subr.bf16.mxu0 0
      %82 = vmatpush1.bf16.msra.mxu0 0
      %83 = vmatprep.subr.bf16.mxu0 0
      %84 = vmatpush1.bf16.msra.mxu0 0
      %85 = vmatprep.subr.bf16.mxu0 0
      %86 = vmatpush1.bf16.msra.mxu0 0
      %87 = vmatprep.subr.bf16.mxu0 0
      %88 = vmatpush1.bf16.msra.mxu0 0
      %89 = vmatprep.subr.bf16.mxu0 0
      %90 = vmatpush1.bf16.msra.mxu0 0
      %91 = vmatprep.subr.bf16.mxu0 0
      %92 = vmatpush1.bf16.msra.mxu0 0
      %93 = vmatprep.subr.bf16.mxu0 0
      %94 = vmatpush1.bf16.msra.mxu0 0
      %95 = vmatprep.subr.bf16.mxu0 0
      %96 = vmatpush1.bf16.msra.mxu0 0
      %97 = vmatprep.subr.bf16.mxu0 0
      %98 = vmatpush1.bf16.msra.mxu0 0
      %99 = vmatprep.subr.bf16.mxu0 0
      %100 = vmatpush1.bf16.msra.mxu0 0
      %101 = vmatprep.subr.bf16.mxu0 0
      %102 = vmatpush1.bf16.msra.mxu0 0
      %103 = vmatprep.subr.bf16.mxu0 0
      %104 = vmatpush1.bf16.msra.mxu0 0
      %105 = vmatprep.subr.bf16.mxu0 0
      %106 = vmatpush1.bf16.msra.mxu0 0
      %107 = vmatprep.subr.bf16.mxu0 0
      %108 = vmatpush1.bf16.msra.mxu0 0
      %109 = vmatprep.mubr.bf16.mxu0 0
      %110 = vmatmul.mubr.bf16.gmra.mrb[0].mxu0 %v75
      %v111 = vpop.f32.mrb[0].mxu0
      %v112 = vadd.f32 %v59, %v111
      %v113 = vpop.f32.mrb[0].mxu0
      %v114 = vpop.f32.mrb[0].mxu0
      %v115 = vpop.f32.mrb[0].mxu0
      %116 = vdwg.mxu0
      %v117 = vadd.f32 %v48, %v112
      %v118 = vld [vmem:[%s4] sm:$0x1]
      %v119 = vld [vmem:[%s5] sm:$0x1]
      %v120 = vsel %vm73, %v117, 0.0
      %121 = vadd.xlane.f32.xlu0 %v120
      %v122 = vpop.xlane.xlu0 %121
      %v123 = vrcp.pop 32.0
      %v124 = vmul.f32 %v122, %v123
      %v125 = vsub.f32 %v117, %v124
      %v126 = vmul.f32 %v125, %v125
      %v127 = vsel %vm73, %v126, 0.0
      %128 = vadd.xlane.f32.xlu0 %v127
      %v129 = vpop.xlane.xlu0 %128
      %v130 = vmul.f32 %v129, %v123
      %v131 = vadd.f32 %v130, 1e-05
      %v132 = vrsqrt.pop %v131
      %v133 = vmul.f32 %v125, %v132
      %v135 = vlaneseq
      %v136 = vshrl.u32 %v135, 7
      %v137 = vsub.s32 0, %v136
      %v138 = vrot.slane %v118, %v137
      %v140 = vmul.f32 %v133, %v138
      %v142 = vlaneseq
      %v143 = vshrl.u32 %v142, 7
      %v144 = vsub.s32 0, %v143
      %v145 = vrot.slane %v119, %v144
      %v147 = vadd.f32 %v140, %v145
      %148 = vst.msk [vmem:[#allocation2] sm:$0xff] %vm73, %v147
      %v149 = vpack.c.bf16 %v147, %v147
      %vm150 = vcmask 257024
      %151 = vst.msk [vmem:[#allocation3] sm:$0xf] %vm150, %v149
    $region53: #{tpu_custom_call.1} parent=1 // pred_fallthru
      _
    %v152 = vld [vmem:[#allocation3] sm:$0xf]
    %v153 = vld [vmem:[%s6] sm:$0xf]
    %v154 = vld [vmem:[%s6 + $0x4] sm:$0xf]
    %v155 = vld [vmem:[%s6 + $0x8] sm:$0xf]
    %v156 = vld [vmem:[%s6 + $0xc] sm:$0xf]
    %v157 = vld [vmem:[%s7] sm:$0x1]
    %v159 = vlaneseq
    %v160 = vshrl.u32 %v159, 7
    %v161 = vsub.s32 0, %v160
    %v162 = vrot.slane %v157, %v161
    %v168 = vunpack.c.l.b16 %v153
    %v169 = vunpack.c.l.b16 %v154
    %v170 = vunpack.c.l.b16 %v155
    %v171 = vunpack.c.l.b16 %v156
    %v172 = vpack.c.b16 %v169, %v168
    %v173 = vpack.c.b16 %v171, %v170
    %vm176 = vcmask 261120
    %v178 = vsel %vm176, %v152, 0
    %180 = vmatprep.subr.bf16.mxu0 0
    %181 = vmatpush1.bf16.msra.mxu0 %v172
    %182 = vmatprep.subr.bf16.mxu0 0
    %183 = vmatpush1.bf16.msra.mxu0 %v173
    %184 = vmatprep.subr.bf16.mxu0 0
    %185 = vmatpush1.bf16.msra.mxu0 0
    %186 = vmatprep.subr.bf16.mxu0 0
    %187 = vmatpush1.bf16.msra.mxu0 0
    %188 = vmatprep.subr.bf16.mxu0 0
    %189 = vmatpush1.bf16.msra.mxu0 0
    %190 = vmatprep.subr.bf16.mxu0 0
    %191 = vmatpush1.bf16.msra.mxu0 0
    %192 = vmatprep.subr.bf16.mxu0 0
    %193 = vmatpush1.bf16.msra.mxu0 0
    %194 = vmatprep.subr.bf16.mxu0 0
    %195 = vmatpush1.bf16.msra.mxu0 0
    %196 = vmatprep.subr.bf16.mxu0 0
    %197 = vmatpush1.bf16.msra.mxu0 0
    %198 = vmatprep.subr.bf16.mxu0 0
    %199 = vmatpush1.bf16.msra.mxu0 0
    %200 = vmatprep.subr.bf16.mxu0 0
    %201 = vmatpush1.bf16.msra.mxu0 0
    %202 = vmatprep.subr.bf16.mxu0 0
    %203 = vmatpush1.bf16.msra.mxu0 0
    %204 = vmatprep.subr.bf16.mxu0 0
    %205 = vmatpush1.bf16.msra.mxu0 0
    %206 = vmatprep.subr.bf16.mxu0 0
    %207 = vmatpush1.bf16.msra.mxu0 0
    %208 = vmatprep.subr.bf16.mxu0 0
    %209 = vmatpush1.bf16.msra.mxu0 0
    %210 = vmatprep.subr.bf16.mxu0 0
    %211 = vmatpush1.bf16.msra.mxu0 0
    %212 = vmatprep.mubr.bf16.mxu0 0
    %213 = vmatmul.mubr.bf16.gmra.mrb[0].mxu0 %v178
    %v214 = vpop.f32.mrb[0].mxu0
    %v215 = vadd.f32 %v162, %v214
    %v216 = vpop.f32.mrb[0].mxu0
    %v217 = vpop.f32.mrb[0].mxu0
    %v218 = vpop.f32.mrb[0].mxu0
    %219 = vdwg.mxu0
    %v220 = vmul.f32 %v215, 0.5
    %v221 = vmul.f32 %v215, 0.70710677
    %v222 = verf.f32.pop %v221
    %v223 = vadd.f32 %v222, 1.0
    %v224 = vmul.f32 %v220, %v223
    %v225 = vpack.c.bf16 %v224, %v224
    %v226 = vld [vmem:[%s8] sm:$0xf]
    %v227 = vld [vmem:[%s8 + $0x4] sm:$0xf]
    %v228 = vld [vmem:[%s8 + $0x8] sm:$0xf]
    %v229 = vld [vmem:[%s8 + $0xc] sm:$0xf]
    %v230 = vld [vmem:[%s8 + $0x10] sm:$0xf]
    %v231 = vld [vmem:[%s8 + $0x14] sm:$0xf]
    %v232 = vld [vmem:[%s8 + $0x18] sm:$0xf]
    %v233 = vld [vmem:[%s8 + $0x1c] sm:$0xf]
    %v234 = vld [vmem:[%s8 + $0x20] sm:$0xf]
    %v235 = vld [vmem:[%s8 + $0x24] sm:$0xf]
    %v236 = vld [vmem:[%s8 + $0x28] sm:$0xf]
    %v237 = vld [vmem:[%s8 + $0x2c] sm:$0xf]
    %v238 = vld [vmem:[%s8 + $0x30] sm:$0xf]
    %v239 = vld [vmem:[%s8 + $0x34] sm:$0xf]
    %v240 = vld [vmem:[%s8 + $0x38] sm:$0xf]
    %v241 = vld [vmem:[%s8 + $0x3c] sm:$0xf]
    %v258 = vunpack.c.l.b16 %v226
    %v259 = vunpack.c.l.b16 %v227
    %v260 = vunpack.c.l.b16 %v228
    %v261 = vunpack.c.l.b16 %v229
    %v262 = vunpack.c.l.b16 %v230
    %v263 = vunpack.c.l.b16 %v231
    %v264 = vunpack.c.l.b16 %v232
    %v265 = vunpack.c.l.b16 %v233
    %v266 = vunpack.c.l.b16 %v234
    %v267 = vunpack.c.l.b16 %v235
    %v268 = vunpack.c.l.b16 %v236
    %v269 = vunpack.c.l.b16 %v237
    %v270 = vunpack.c.l.b16 %v238
    %v271 = vunpack.c.l.b16 %v239
    %v272 = vunpack.c.l.b16 %v240
    %v273 = vunpack.c.l.b16 %v241
    %v274 = vpack.c.b16 %v259, %v258
    %v275 = vpack.c.b16 %v261, %v260
    %v276 = vpack.c.b16 %v263, %v262
    %v277 = vpack.c.b16 %v265, %v264
    %v278 = vpack.c.b16 %v267, %v266
    %v279 = vpack.c.b16 %v269, %v268
    %v280 = vpack.c.b16 %v271, %v270
    %v281 = vpack.c.b16 %v273, %v272
    %290 = vmatprep.subr.bf16.mxu0 0
    %291 = vmatpush1.bf16.msra.mxu0 %v274
    %292 = vmatprep.subr.bf16.mxu0 0
    %293 = vmatpush1.bf16.msra.mxu0 %v275
    %294 = vmatprep.subr.bf16.mxu0 0
    %295 = vmatpush1.bf16.msra.mxu0 %v276
    %296 = vmatprep.subr.bf16.mxu0 0
    %297 = vmatpush1.bf16.msra.mxu0 %v277
    %298 = vmatprep.subr.bf16.mxu0 0
    %299 = vmatpush1.bf16.msra.mxu0 %v278
    %300 = vmatprep.subr.bf16.mxu0 0
    %301 = vmatpush1.bf16.msra.mxu0 %v279
    %302 = vmatprep.subr.bf16.mxu0 0
    %303 = vmatpush1.bf16.msra.mxu0 %v280
    %304 = vmatprep.subr.bf16.mxu0 0
    %305 = vmatpush1.bf16.msra.mxu0 %v281
    %306 = vmatprep.subr.bf16.mxu0 0
    %307 = vmatpush1.bf16.msra.mxu0 0
    %308 = vmatprep.subr.bf16.mxu0 0
    %309 = vmatpush1.bf16.msra.mxu0 0
    %310 = vmatprep.subr.bf16.mxu0 0
    %311 = vmatpush1.bf16.msra.mxu0 0
    %312 = vmatprep.subr.bf16.mxu0 0
    %313 = vmatpush1.bf16.msra.mxu0 0
    %314 = vmatprep.subr.bf16.mxu0 0
    %315 = vmatpush1.bf16.msra.mxu0 0
    %316 = vmatprep.subr.bf16.mxu0 0
    %317 = vmatpush1.bf16.msra.mxu0 0
    %318 = vmatprep.subr.bf16.mxu0 0
    %319 = vmatpush1.bf16.msra.mxu0 0
    %320 = vmatprep.subr.bf16.mxu0 0
    %321 = vmatpush1.bf16.msra.mxu0 0
    %322 = vmatprep.mubr.bf16.mxu0 0
    %323 = vmatmul.mubr.bf16.gmra.mrb[0].mxu0 %v225
    %v324 = vpop.f32.mrb[0].mxu0
    %v325 = vadd.f32 0.0, %v324
    %v326 = vpop.f32.mrb[0].mxu0
    %v327 = vpop.f32.mrb[0].mxu0
    %v328 = vpop.f32.mrb[0].mxu0
    %329 = vdwg.mxu0
    // Predicated region
    $region54: #{tpu_custom_call.1} parent=1 // pred_check
      %p330 = pneg %p43
    $region55: #{tpu_custom_call.1} parent=1 // pred_check_branch
      %332 = sbr.rel (%p330) target = $region57
    $region56: #{tpu_custom_call.1} parent=1 // pred_region
      %333 = vst.msk [vmem:[#allocation4] sm:$0xff] %vm176, %v325
    $region57: #{tpu_custom_call.1} parent=1 // pred_fallthru
      _
    %p334 = scmp.ne.s32.totalorder 0, 0
    // Predicated region
    $region58: #{tpu_custom_call.1} parent=1 // pred_check
      %p335 = pneg %p334
    $region59: #{tpu_custom_call.1} parent=1 // pred_check_branch
      %337 = sbr.rel (%p335) target = $region61
    $region60: #{tpu_custom_call.1} parent=1 // pred_region
      %v338 = vld [vmem:[#allocation4] sm:$0xff]
      %v339 = vadd.f32 %v338, %v325
      %340 = vst.msk [vmem:[#allocation4] sm:$0xff] %vm176, %v339
    $region61: #{tpu_custom_call.1} parent=1 // pred_fallthru
      _
    // Predicated region
    $region62: #{tpu_custom_call.1} parent=1 // pred_check
      %p341 = pneg %p43
    $region63: #{tpu_custom_call.1} parent=1 // pred_check_branch
      %343 = sbr.rel (%p341) target = $region65
    $region64: #{tpu_custom_call.1} parent=1 // pred_region
      %v344 = vld [vmem:[#allocation4] sm:$0xff]
      %v345 = vld [vmem:[%s9] sm:$0x1]
      %v347 = vlaneseq
      %v348 = vshrl.u32 %v347, 7
      %v349 = vsub.s32 0, %v348
      %v350 = vrot.slane %v345, %v349
      %v352 = vadd.f32 %v344, %v350
      %v353 = vld [vmem:[#allocation2] sm:$0xff]
      %v354 = vadd.f32 %v353, %v352
      %v355 = vld [vmem:[%s10] sm:$0x1]
      %v356 = vld [vmem:[%s11] sm:$0x1]
      %v357 = vsel %vm176, %v354, 0.0
      %358 = vadd.xlane.f32.xlu0 %v357
      %v359 = vpop.xlane.xlu0 %358
      %v360 = vrcp.pop 32.0
      %v361 = vmul.f32 %v359, %v360
      %v362 = vsub.f32 %v354, %v361
      %v363 = vmul.f32 %v362, %v362
      %v364 = vsel %vm176, %v363, 0.0
      %365 = vadd.xlane.f32.xlu0 %v364
      %v366 = vpop.xlane.xlu0 %365
      %v367 = vmul.f32 %v366, %v360
      %v368 = vadd.f32 %v367, 1e-05
      %v369 = vrsqrt.pop %v368
      %v370 = vmul.f32 %v362, %v369
      %v372 = vlaneseq
      %v373 = vshrl.u32 %v372, 7
      %v374 = vsub.s32 0, %v373
      %v375 = vrot.slane %v355, %v374
      %v377 = vmul.f32 %v370, %v375
      %v379 = vlaneseq
      %v380 = vshrl.u32 %v379, 7
      %v381 = vsub.s32 0, %v380
      %v382 = vrot.slane %v356, %v381
      %v384 = vadd.f32 %v377, %v382
      %385 = vst.msk [vmem:[#allocation4] sm:$0xff] %vm176, %v384
    $region65: #{tpu_custom_call.1} parent=1 // pred_fallthru
      _
    // Predicated region
    $region66: #{tpu_custom_call.1} parent=1 // pred_check
      _
    $region67: #{tpu_custom_call.1} parent=1 // pred_check_branch
      %387 = sbr.rel (0) target = $region69
    $region68: #{tpu_custom_call.1} parent=1 // pred_region
      %s389 = ssub.s32 128, 128
      %390 = vsyncadd [#allocation5], %s389
      %s392 = sshll.u32 [#allocation4], 4
      %s393 = int_to_ptr.vmem [resolvable:$true] %s392
      %395 = dma.vmem_to_hbm [thread:$0]  %s393, 128, %s12, [#allocation5]
    $region69: #{tpu_custom_call.1} parent=1 // pred_fallthru
      _
    // Predicated region
    $region70: #{tpu_custom_call.1} parent=1 // pred_check
      _
    $region71: #{tpu_custom_call.1} parent=1 // pred_check_branch
      %397 = sbr.rel (0) target = $region73
    $region72: #{tpu_custom_call.1} parent=1 // pred_region
      %398 = dma.done [#allocation5], 128
    $region73: #{tpu_custom_call.1} parent=1 // pred_fallthru
      _
    %399 = vsyncpa [#allocation5], 1

</llo_original>
